<compile_context>
chip_gen: v5e
topology: v5e:2x2
jax: 0.10.0
libtpu: 0.0.40
codegen_flags: <defaults>
</compile_context>

<pallas_src>
import numpy as np
import jax
import jax.numpy as jnp
from jax.experimental import pallas as pl
from jax.experimental.pallas import tpu as pltpu


# ----------------------- host-side operator builders ---------------------- #
def _conv_out_size(n, k, s, p):
    return (n + 2 * p - k) // s + 1


def _conv_tap_selection(h_in, w_in, h_out, w_out, ksize, stride, pad):
    """(k*k, h_in*w_in, h_out*w_out) 0/1 gather matrices. (X @ G[t]) picks, for
    every output pixel, the input pixel seen by kernel tap t; taps that land in
    the zero-padding region get an all-zero column (padding folded in)."""
    s_in, s_out = h_in * w_in, h_out * w_out
    g = np.zeros((ksize * ksize, s_in, s_out), dtype=np.float32)
    for kh in range(ksize):
        for kw in range(ksize):
            t = kh * ksize + kw
            for i in range(h_out):
                r = stride * i + kh - pad
                if r < 0 or r >= h_in:
                    continue
                for j in range(w_out):
                    c = stride * j + kw - pad
                    if c < 0 or c >= w_in:
                        continue
                    g[t, r * w_in + c, i * w_out + j] = 1.0
    return g


def _interp_matrix(in_size, out_size):
    """Row-stochastic 1-D bilinear interpolation matrix, PyTorch
    align_corners=False semantics: src = max((o+0.5)*scale - 0.5, 0)."""
    a = np.zeros((out_size, in_size), dtype=np.float32)
    scale = in_size / out_size
    for o in range(out_size):
        src = max((o + 0.5) * scale - 0.5, 0.0)
        i0 = min(int(np.floor(src)), in_size - 1)
        i1 = min(i0 + 1, in_size - 1)
        w1 = src - i0
        a[o, i0] += 1.0 - w1
        a[o, i1] += w1
    return a


def _upsample_factors(h_in, w_in, h_out, w_out):
    """Separable bilinear resize for (C, H*W)-flattened activations: stage 1
    applies only Ah (rows), stage 2 applies only Aw (cols).  Each factor is
    block-structured (Ah x I / I x Aw); the dense kron(Ah, Aw) interpolation
    matrix of size (h_out*w_out, h_in*w_in) is never formed."""
    ah = _interp_matrix(h_in, h_out)                              # (h_out, h_in)
    aw = _interp_matrix(w_in, w_out)                              # (w_out, w_in)
    p_rows = np.kron(ah, np.eye(w_in, dtype=np.float32)).T        # (h_in*w_in , h_out*w_in)
    p_cols = np.kron(np.eye(h_out, dtype=np.float32), aw).T       # (h_out*w_in, h_out*w_out)
    return p_rows, p_cols


# ------------------------------ fused kernel ------------------------------ #
def _fused_forward_kernel(x_ref, g1_ref, w1_ref, b1_ref,
                          g2_ref, w2_ref, b2_ref,
                          wc_ref, bc_ref, pr_ref, pc_ref, o_ref):
    """One image per grid step.  All intermediates stay VMEM/register resident;
    every matmul runs bf16 x bf16 -> f32 accumulate on the MXU."""
    f32, bf16 = jnp.float32, jnp.bfloat16

    def conv_relu(x_bf, g_ref, wt_ref, b_ref):
        # out = ReLU( sum_t  W[t]^T @ (X @ G[t]) + b )  -- 2-D MXU matmuls only.
        c_out = wt_ref.shape[1]
        s_out = g_ref.shape[2]
        acc = jnp.zeros((c_out, s_out), f32)
        for t in range(g_ref.shape[0]):                 # statically unrolled (9 taps)
            gathered = jnp.dot(x_bf, g_ref[t], preferred_element_type=f32)
            acc = acc + jnp.dot(wt_ref[t], gathered.astype(bf16),
                                preferred_element_type=f32)
        return jnp.maximum(acc + b_ref[...], 0.0)       # bias (C,1) broadcasts over lanes

    x = x_ref[0]                                        # (Cin, H*W) bf16
    h1 = conv_relu(x, g1_ref, w1_ref, b1_ref)           # (C1, H1*W1) f32
    h2 = conv_relu(h1.astype(bf16), g2_ref, w2_ref, b2_ref)   # (C2, H2*W2) f32

    # 1x1-conv classifier head, fused as the conv2 epilogue (no separate pass)
    logits = jnp.dot(wc_ref[...], h2.astype(bf16),
                     preferred_element_type=f32) + bc_ref[...]        # (K, H2*W2)

    # separable bilinear upsample: rows stage (Ah only), then cols stage (Aw only)
    up_rows = jnp.dot(logits.astype(bf16), pr_ref[...], preferred_element_type=f32)
    up_full = jnp.dot(up_rows.astype(bf16), pc_ref[...], preferred_element_type=f32)

    o_ref[0] = up_full.astype(o_ref.dtype)              # (K, H*W): lane-dense store


# --------------------------- model definition ------------------------------ #
def init_params(key, c_in=4, c_mid1=8, c_mid2=16, num_classes=3):
    k1, k2, k3, k4, k5, k6 = jax.random.split(key, 6)
    s1 = 1.0 / np.sqrt(9 * c_in)
    s2 = 1.0 / np.sqrt(9 * c_mid1)
    s3 = 1.0 / np.sqrt(c_mid2)
    return {
        "w1": jax.random.uniform(k1, (3, 3, c_in, c_mid1), jnp.float32, -s1, s1),
        "b1": jax.random.uniform(k2, (c_mid1,), jnp.float32, -s1, s1),
        "w2": jax.random.uniform(k3, (3, 3, c_mid1, c_mid2), jnp.float32, -s2, s2),
        "b2": jax.random.uniform(k4, (c_mid2,), jnp.float32, -s2, s2),
        "wc": jax.random.uniform(k5, (c_mid2, num_classes), jnp.float32, -s3, s3),
        "bc": jax.random.uniform(k6, (num_classes,), jnp.float32, -s3, s3),
    }


def custom_deeplabv3_forward(x_nchw, params):
    """Mirrors CustomDeepLabV3.forward: backbone -> classifier -> bilinear
    upsample to the input spatial size -> {'out': ...}.  NCHW in / NCHW out."""
    n, c_in, h, w = x_nchw.shape
    c1 = params["w1"].shape[-1]
    c2 = params["w2"].shape[-1]
    k_cls = params["wc"].shape[-1]
    h1, w1 = _conv_out_size(h, 3, 2, 1), _conv_out_size(w, 3, 2, 1)
    h2, w2 = _conv_out_size(h1, 3, 2, 1), _conv_out_size(w1, 3, 2, 1)

    bf16 = jnp.bfloat16
    # host-precomputed structured operators (shape-only, tiny, bf16 operands)
    g1 = jnp.asarray(_conv_tap_selection(h, w, h1, w1, 3, 2, 1), bf16)
    g2 = jnp.asarray(_conv_tap_selection(h1, w1, h2, w2, 3, 2, 1), bf16)
    p_rows_np, p_cols_np = _upsample_factors(h2, w2, h, w)
    p_rows = jnp.asarray(p_rows_np, bf16)
    p_cols = jnp.asarray(p_cols_np, bf16)

    # pack conv weights for the (channels, H*W) layout: (9, Cout, Cin) stacks
    wt1 = jnp.transpose(params["w1"].reshape(9, c_in, c1), (0, 2, 1)).astype(bf16)
    wt2 = jnp.transpose(params["w2"].reshape(9, c1, c2), (0, 2, 1)).astype(bf16)
    wtc = jnp.transpose(params["wc"]).astype(bf16)                # (K, C2)
    b1 = params["b1"].reshape(c1, 1).astype(jnp.float32)          # channel bias on sublanes
    b2 = params["b2"].reshape(c2, 1).astype(jnp.float32)
    bc = params["bc"].reshape(k_cls, 1).astype(jnp.float32)

    # NCHW -> (N, C, H*W): a pure reshape, no transpose / extra HBM copy
    x_flat = x_nchw.reshape(n, c_in, h * w).astype(bf16)

    def _resident(arr):   # weights / operators: same block for every grid step
        return pl.BlockSpec(arr.shape, lambda i, nd=arr.ndim: (0,) * nd)

    out_flat = pl.pallas_call(
        _fused_forward_kernel,
        out_shape=jax.ShapeDtypeStruct((n, k_cls, h * w), jnp.float32),
        grid=(n,),                                      # one image per grid step
        in_specs=[
            pl.BlockSpec((1, c_in, h * w), lambda i: (i, 0, 0)),
            _resident(g1), _resident(wt1), _resident(b1),
            _resident(g2), _resident(wt2), _resident(b2),
            _resident(wtc), _resident(bc),
            _resident(p_rows), _resident(p_cols),
        ],
        out_specs=pl.BlockSpec((1, k_cls, h * w), lambda i: (i, 0, 0)),
        compiler_params=pltpu.CompilerParams(
            dimension_semantics=("parallel",)),         # megacore: images across TCs
    )(x_flat, g1, wt1, b1, g2, wt2, b2, wtc, bc, p_rows, p_cols)

    return {"out": out_flat.reshape(n, k_cls, h, w)}


# --------------------------- reference (validation) ------------------------ #
def _reference_forward(x_nchw, params):
    """Independent reference (lax conv + einsum bilinear) mirroring the kernel's
    bf16-operand / f32-accumulate numerics."""
    f32 = jnp.float32
    q = lambda a: a.astype(jnp.bfloat16).astype(f32)
    dn = ("NCHW", "OIHW", "NCHW")

    y = jax.lax.conv_general_dilated(
        q(x_nchw), jnp.transpose(q(params["w1"]), (3, 2, 0, 1)),
        (2, 2), [(1, 1), (1, 1)], dimension_numbers=dn)
    y = jax.nn.relu(y + params["b1"][None, :, None, None])
    y = jax.lax.conv_general_dilated(
        q(y), jnp.transpose(q(params["w2"]), (3, 2, 0, 1)),
        (2, 2), [(1, 1), (1, 1)], dimension_numbers=dn)
    y = jax.nn.relu(y + params["b2"][None, :, None, None])
    y = jnp.einsum("nchw,ck->nkhw", q(y), q(params["wc"]))
    y = y + params["bc"][None, :, None, None]

    h_out, w_out = x_nchw.shape[-2:]
    ah = q(jnp.asarray(_interp_matrix(y.shape[2], h_out)))
    aw = q(jnp.asarray(_interp_matrix(y.shape[3], w_out)))
    return jnp.einsum("ai,bj,nkij->nkab", ah, aw, q(y))


if __name__ == "__main__":
    key = jax.random.PRNGKey(0)
    k_x, k_p = jax.random.split(key)
    x = jax.random.normal(k_x, (2, 4, 16, 16), dtype=jnp.float32)   # NCHW input
    params = init_params(k_p)

    out = custom_deeplabv3_forward(x, params)
    out = jax.tree_util.tree_map(jax.block_until_ready, out)

    assert out["out"].shape == (2, 3, 16, 16), out["out"].shape
    assert out["out"].dtype == jnp.float32

    ref = jax.block_until_ready(_reference_forward(x, params))
    err = float(jnp.max(jnp.abs(out["out"] - ref)))
    assert err < 5e-2, f"max |pallas - reference| = {err}"

    print("KERNEL_OK")
</pallas_src>

<mosaic_0001>
module attributes {stable_mosaic.version = 11 : i64} {
  func.func @_fused_forward_kernel(%arg0: i32, %arg1: memref<1x4x256xbf16, #tpu.memory_space<vmem>>, %arg2: memref<9x256x64xbf16, #tpu.memory_space<vmem>>, %arg3: memref<9x8x4xbf16, #tpu.memory_space<vmem>>, %arg4: memref<8x1xf32, #tpu.memory_space<vmem>>, %arg5: memref<9x64x16xbf16, #tpu.memory_space<vmem>>, %arg6: memref<9x16x8xbf16, #tpu.memory_space<vmem>>, %arg7: memref<16x1xf32, #tpu.memory_space<vmem>>, %arg8: memref<3x16xbf16, #tpu.memory_space<vmem>>, %arg9: memref<3x1xf32, #tpu.memory_space<vmem>>, %arg10: memref<16x64xbf16, #tpu.memory_space<vmem>>, %arg11: memref<64x256xbf16, #tpu.memory_space<vmem>>, %arg12: memref<1x3x256xf32, #tpu.memory_space<vmem>>) attributes {dimension_semantics = [#tpu.dimension_semantics<parallel>], iteration_bounds = array<i64: 2>, scalar_prefetch = 0 : i64, scratch_operands = 0 : i64, tpu.core_type = #tpu.core_type<tc>, window_params = [{transform_indices = @transform_0, window_bounds = array<i64: 1, 4, 256>}, {pipeline_mode = #tpu.pipeline_mode<synchronous>, transform_indices = @transform_1, window_bounds = array<i64: 9, 256, 64>}, {pipeline_mode = #tpu.pipeline_mode<synchronous>, transform_indices = @transform_2, window_bounds = array<i64: 9, 8, 4>}, {pipeline_mode = #tpu.pipeline_mode<synchronous>, transform_indices = @transform_3, window_bounds = array<i64: 8, 1>}, {pipeline_mode = #tpu.pipeline_mode<synchronous>, transform_indices = @transform_4, window_bounds = array<i64: 9, 64, 16>}, {pipeline_mode = #tpu.pipeline_mode<synchronous>, transform_indices = @transform_5, window_bounds = array<i64: 9, 16, 8>}, {pipeline_mode = #tpu.pipeline_mode<synchronous>, transform_indices = @transform_6, window_bounds = array<i64: 16, 1>}, {pipeline_mode = #tpu.pipeline_mode<synchronous>, transform_indices = @transform_7, window_bounds = array<i64: 3, 16>}, {pipeline_mode = #tpu.pipeline_mode<synchronous>, transform_indices = @transform_8, window_bounds = array<i64: 3, 1>}, {pipeline_mode = #tpu.pipeline_mode<synchronous>, transform_indices = @transform_9, window_bounds = array<i64: 16, 64>}, {pipeline_mode = #tpu.pipeline_mode<synchronous>, transform_indices = @transform_10, window_bounds = array<i64: 64, 256>}, {transform_indices = @transform_11, window_bounds = array<i64: 1, 3, 256>}]} {
    %c0 = arith.constant 0 : index
    %c0_0 = arith.constant 0 : index
    %c0_1 = arith.constant 0 : index
    %0 = vector.load %arg1[%c0, %c0_0, %c0_1] : memref<1x4x256xbf16, #tpu.memory_space<vmem>>, vector<1x4x256xbf16>
    %1 = vector.shape_cast %0 : vector<1x4x256xbf16> to vector<4x256xbf16>
    %cst = arith.constant 0.000000e+00 : f32
    %2 = vector.broadcast %cst : f32 to vector<8x64xf32>
    %c0_2 = arith.constant 0 : index
    %c0_3 = arith.constant 0 : index
    %c0_4 = arith.constant 0 : index
    %3 = vector.load %arg2[%c0_2, %c0_3, %c0_4] : memref<9x256x64xbf16, #tpu.memory_space<vmem>>, vector<1x256x64xbf16>
    %4 = vector.shape_cast %3 : vector<1x256x64xbf16> to vector<256x64xbf16>
    %cst_5 = arith.constant dense<0.000000e+00> : vector<4x64xf32>
    %5 = tpu.matmul %1, %4, %cst_5 {dimension_numbers = #tpu.dot_dimension_numbers<[1], [0], [0], [1], [0, 0, 1, 1], [], []>} : vector<4x256xbf16>, vector<256x64xbf16>, vector<4x64xf32> -> vector<4x64xf32>
    %c0_6 = arith.constant 0 : index
    %c0_7 = arith.constant 0 : index
    %c0_8 = arith.constant 0 : index
    %6 = vector.load %arg3[%c0_6, %c0_7, %c0_8] : memref<9x8x4xbf16, #tpu.memory_space<vmem>>, vector<1x8x4xbf16>
    %7 = vector.shape_cast %6 : vector<1x8x4xbf16> to vector<8x4xbf16>
    %8 = arith.truncf %5 : vector<4x64xf32> to vector<4x64xbf16>
    %cst_9 = arith.constant dense<0.000000e+00> : vector<8x64xf32>
    %9 = tpu.matmul %7, %8, %cst_9 {dimension_numbers = #tpu.dot_dimension_numbers<[1], [0], [0], [1], [0, 0, 1, 1], [], []>} : vector<8x4xbf16>, vector<4x64xbf16>, vector<8x64xf32> -> vector<8x64xf32>
    %10 = arith.addf %2, %9 : vector<8x64xf32>
    %c1 = arith.constant 1 : index
    %c0_10 = arith.constant 0 : index
    %c0_11 = arith.constant 0 : index
    %11 = vector.load %arg2[%c1, %c0_10, %c0_11] : memref<9x256x64xbf16, #tpu.memory_space<vmem>>, vector<1x256x64xbf16>
    %12 = vector.shape_cast %11 : vector<1x256x64xbf16> to vector<256x64xbf16>
    %cst_12 = arith.constant dense<0.000000e+00> : vector<4x64xf32>
    %13 = tpu.matmul %1, %12, %cst_12 {dimension_numbers = #tpu.dot_dimension_numbers<[1], [0], [0], [1], [0, 0, 1, 1], [], []>} : vector<4x256xbf16>, vector<256x64xbf16>, vector<4x64xf32> -> vector<4x64xf32>
    %c1_13 = arith.constant 1 : index
    %c0_14 = arith.constant 0 : index
    %c0_15 = arith.constant 0 : index
    %14 = vector.load %arg3[%c1_13, %c0_14, %c0_15] : memref<9x8x4xbf16, #tpu.memory_space<vmem>>, vector<1x8x4xbf16>
    %15 = vector.shape_cast %14 : vector<1x8x4xbf16> to vector<8x4xbf16>
    %16 = arith.truncf %13 : vector<4x64xf32> to vector<4x64xbf16>
    %cst_16 = arith.constant dense<0.000000e+00> : vector<8x64xf32>
    %17 = tpu.matmul %15, %16, %cst_16 {dimension_numbers = #tpu.dot_dimension_numbers<[1], [0], [0], [1], [0, 0, 1, 1], [], []>} : vector<8x4xbf16>, vector<4x64xbf16>, vector<8x64xf32> -> vector<8x64xf32>
    %18 = arith.addf %10, %17 : vector<8x64xf32>
    %c2 = arith.constant 2 : index
    %c0_17 = arith.constant 0 : index
    %c0_18 = arith.constant 0 : index
    %19 = vector.load %arg2[%c2, %c0_17, %c0_18] : memref<9x256x64xbf16, #tpu.memory_space<vmem>>, vector<1x256x64xbf16>
    %20 = vector.shape_cast %19 : vector<1x256x64xbf16> to vector<256x64xbf16>
    %cst_19 = arith.constant dense<0.000000e+00> : vector<4x64xf32>
    %21 = tpu.matmul %1, %20, %cst_19 {dimension_numbers = #tpu.dot_dimension_numbers<[1], [0], [0], [1], [0, 0, 1, 1], [], []>} : vector<4x256xbf16>, vector<256x64xbf16>, vector<4x64xf32> -> vector<4x64xf32>
    %c2_20 = arith.constant 2 : index
    %c0_21 = arith.constant 0 : index
    %c0_22 = arith.constant 0 : index
    %22 = vector.load %arg3[%c2_20, %c0_21, %c0_22] : memref<9x8x4xbf16, #tpu.memory_space<vmem>>, vector<1x8x4xbf16>
    %23 = vector.shape_cast %22 : vector<1x8x4xbf16> to vector<8x4xbf16>
    %24 = arith.truncf %21 : vector<4x64xf32> to vector<4x64xbf16>
    %cst_23 = arith.constant dense<0.000000e+00> : vector<8x64xf32>
    %25 = tpu.matmul %23, %24, %cst_23 {dimension_numbers = #tpu.dot_dimension_numbers<[1], [0], [0], [1], [0, 0, 1, 1], [], []>} : vector<8x4xbf16>, vector<4x64xbf16>, vector<8x64xf32> -> vector<8x64xf32>
    %26 = arith.addf %18, %25 : vector<8x64xf32>
    %c3 = arith.constant 3 : index
    %c0_24 = arith.constant 0 : index
    %c0_25 = arith.constant 0 : index
    %27 = vector.load %arg2[%c3, %c0_24, %c0_25] : memref<9x256x64xbf16, #tpu.memory_space<vmem>>, vector<1x256x64xbf16>
    %28 = vector.shape_cast %27 : vector<1x256x64xbf16> to vector<256x64xbf16>
    %cst_26 = arith.constant dense<0.000000e+00> : vector<4x64xf32>
    %29 = tpu.matmul %1, %28, %cst_26 {dimension_numbers = #tpu.dot_dimension_numbers<[1], [0], [0], [1], [0, 0, 1, 1], [], []>} : vector<4x256xbf16>, vector<256x64xbf16>, vector<4x64xf32> -> vector<4x64xf32>
    %c3_27 = arith.constant 3 : index
    %c0_28 = arith.constant 0 : index
    %c0_29 = arith.constant 0 : index
    %30 = vector.load %arg3[%c3_27, %c0_28, %c0_29] : memref<9x8x4xbf16, #tpu.memory_space<vmem>>, vector<1x8x4xbf16>
    %31 = vector.shape_cast %30 : vector<1x8x4xbf16> to vector<8x4xbf16>
    %32 = arith.truncf %29 : vector<4x64xf32> to vector<4x64xbf16>
    %cst_30 = arith.constant dense<0.000000e+00> : vector<8x64xf32>
    %33 = tpu.matmul %31, %32, %cst_30 {dimension_numbers = #tpu.dot_dimension_numbers<[1], [0], [0], [1], [0, 0, 1, 1], [], []>} : vector<8x4xbf16>, vector<4x64xbf16>, vector<8x64xf32> -> vector<8x64xf32>
    %34 = arith.addf %26, %33 : vector<8x64xf32>
    %c4 = arith.constant 4 : index
    %c0_31 = arith.constant 0 : index
    %c0_32 = arith.constant 0 : index
    %35 = vector.load %arg2[%c4, %c0_31, %c0_32] : memref<9x256x64xbf16, #tpu.memory_space<vmem>>, vector<1x256x64xbf16>
    %36 = vector.shape_cast %35 : vector<1x256x64xbf16> to vector<256x64xbf16>
    %cst_33 = arith.constant dense<0.000000e+00> : vector<4x64xf32>
    %37 = tpu.matmul %1, %36, %cst_33 {dimension_numbers = #tpu.dot_dimension_numbers<[1], [0], [0], [1], [0, 0, 1, 1], [], []>} : vector<4x256xbf16>, vector<256x64xbf16>, vector<4x64xf32> -> vector<4x64xf32>
    %c4_34 = arith.constant 4 : index
    %c0_35 = arith.constant 0 : index
    %c0_36 = arith.constant 0 : index
    %38 = vector.load %arg3[%c4_34, %c0_35, %c0_36] : memref<9x8x4xbf16, #tpu.memory_space<vmem>>, vector<1x8x4xbf16>
    %39 = vector.shape_cast %38 : vector<1x8x4xbf16> to vector<8x4xbf16>
    %40 = arith.truncf %37 : vector<4x64xf32> to vector<4x64xbf16>
    %cst_37 = arith.constant dense<0.000000e+00> : vector<8x64xf32>
    %41 = tpu.matmul %39, %40, %cst_37 {dimension_numbers = #tpu.dot_dimension_numbers<[1], [0], [0], [1], [0, 0, 1, 1], [], []>} : vector<8x4xbf16>, vector<4x64xbf16>, vector<8x64xf32> -> vector<8x64xf32>
    %42 = arith.addf %34, %41 : vector<8x64xf32>
    %c5 = arith.constant 5 : index
    %c0_38 = arith.constant 0 : index
    %c0_39 = arith.constant 0 : index
    %43 = vector.load %arg2[%c5, %c0_38, %c0_39] : memref<9x256x64xbf16, #tpu.memory_space<vmem>>, vector<1x256x64xbf16>
    %44 = vector.shape_cast %43 : vector<1x256x64xbf16> to vector<256x64xbf16>
    %cst_40 = arith.constant dense<0.000000e+00> : vector<4x64xf32>
    %45 = tpu.matmul %1, %44, %cst_40 {dimension_numbers = #tpu.dot_dimension_numbers<[1], [0], [0], [1], [0, 0, 1, 1], [], []>} : vector<4x256xbf16>, vector<256x64xbf16>, vector<4x64xf32> -> vector<4x64xf32>
    %c5_41 = arith.constant 5 : index
    %c0_42 = arith.constant 0 : index
    %c0_43 = arith.constant 0 : index
    %46 = vector.load %arg3[%c5_41, %c0_42, %c0_43] : memref<9x8x4xbf16, #tpu.memory_space<vmem>>, vector<1x8x4xbf16>
    %47 = vector.shape_cast %46 : vector<1x8x4xbf16> to vector<8x4xbf16>
    %48 = arith.truncf %45 : vector<4x64xf32> to vector<4x64xbf16>
    %cst_44 = arith.constant dense<0.000000e+00> : vector<8x64xf32>
    %49 = tpu.matmul %47, %48, %cst_44 {dimension_numbers = #tpu.dot_dimension_numbers<[1], [0], [0], [1], [0, 0, 1, 1], [], []>} : vector<8x4xbf16>, vector<4x64xbf16>, vector<8x64xf32> -> vector<8x64xf32>
    %50 = arith.addf %42, %49 : vector<8x64xf32>
    %c6 = arith.constant 6 : index
    %c0_45 = arith.constant 0 : index
    %c0_46 = arith.constant 0 : index
    %51 = vector.load %arg2[%c6, %c0_45, %c0_46] : memref<9x256x64xbf16, #tpu.memory_space<vmem>>, vector<1x256x64xbf16>
    %52 = vector.shape_cast %51 : vector<1x256x64xbf16> to vector<256x64xbf16>
    %cst_47 = arith.constant dense<0.000000e+00> : vector<4x64xf32>
    %53 = tpu.matmul %1, %52, %cst_47 {dimension_numbers = #tpu.dot_dimension_numbers<[1], [0], [0], [1], [0, 0, 1, 1], [], []>} : vector<4x256xbf16>, vector<256x64xbf16>, vector<4x64xf32> -> vector<4x64xf32>
    %c6_48 = arith.constant 6 : index
    %c0_49 = arith.constant 0 : index
    %c0_50 = arith.constant 0 : index
    %54 = vector.load %arg3[%c6_48, %c0_49, %c0_50] : memref<9x8x4xbf16, #tpu.memory_space<vmem>>, vector<1x8x4xbf16>
    %55 = vector.shape_cast %54 : vector<1x8x4xbf16> to vector<8x4xbf16>
    %56 = arith.truncf %53 : vector<4x64xf32> to vector<4x64xbf16>
    %cst_51 = arith.constant dense<0.000000e+00> : vector<8x64xf32>
    %57 = tpu.matmul %55, %56, %cst_51 {dimension_numbers = #tpu.dot_dimension_numbers<[1], [0], [0], [1], [0, 0, 1, 1], [], []>} : vector<8x4xbf16>, vector<4x64xbf16>, vector<8x64xf32> -> vector<8x64xf32>
    %58 = arith.addf %50, %57 : vector<8x64xf32>
    %c7 = arith.constant 7 : index
    %c0_52 = arith.constant 0 : index
    %c0_53 = arith.constant 0 : index
    %59 = vector.load %arg2[%c7, %c0_52, %c0_53] : memref<9x256x64xbf16, #tpu.memory_space<vmem>>, vector<1x256x64xbf16>
    %60 = vector.shape_cast %59 : vector<1x256x64xbf16> to vector<256x64xbf16>
    %cst_54 = arith.constant dense<0.000000e+00> : vector<4x64xf32>
    %61 = tpu.matmul %1, %60, %cst_54 {dimension_numbers = #tpu.dot_dimension_numbers<[1], [0], [0], [1], [0, 0, 1, 1], [], []>} : vector<4x256xbf16>, vector<256x64xbf16>, vector<4x64xf32> -> vector<4x64xf32>
    %c7_55 = arith.constant 7 : index
    %c0_56 = arith.constant 0 : index
    %c0_57 = arith.constant 0 : index
    %62 = vector.load %arg3[%c7_55, %c0_56, %c0_57] : memref<9x8x4xbf16, #tpu.memory_space<vmem>>, vector<1x8x4xbf16>
    %63 = vector.shape_cast %62 : vector<1x8x4xbf16> to vector<8x4xbf16>
    %64 = arith.truncf %61 : vector<4x64xf32> to vector<4x64xbf16>
    %cst_58 = arith.constant dense<0.000000e+00> : vector<8x64xf32>
    %65 = tpu.matmul %63, %64, %cst_58 {dimension_numbers = #tpu.dot_dimension_numbers<[1], [0], [0], [1], [0, 0, 1, 1], [], []>} : vector<8x4xbf16>, vector<4x64xbf16>, vector<8x64xf32> -> vector<8x64xf32>
    %66 = arith.addf %58, %65 : vector<8x64xf32>
    %c8 = arith.constant 8 : index
    %c0_59 = arith.constant 0 : index
    %c0_60 = arith.constant 0 : index
    %67 = vector.load %arg2[%c8, %c0_59, %c0_60] : memref<9x256x64xbf16, #tpu.memory_space<vmem>>, vector<1x256x64xbf16>
    %68 = vector.shape_cast %67 : vector<1x256x64xbf16> to vector<256x64xbf16>
    %cst_61 = arith.constant dense<0.000000e+00> : vector<4x64xf32>
    %69 = tpu.matmul %1, %68, %cst_61 {dimension_numbers = #tpu.dot_dimension_numbers<[1], [0], [0], [1], [0, 0, 1, 1], [], []>} : vector<4x256xbf16>, vector<256x64xbf16>, vector<4x64xf32> -> vector<4x64xf32>
    %c8_62 = arith.constant 8 : index
    %c0_63 = arith.constant 0 : index
    %c0_64 = arith.constant 0 : index
    %70 = vector.load %arg3[%c8_62, %c0_63, %c0_64] : memref<9x8x4xbf16, #tpu.memory_space<vmem>>, vector<1x8x4xbf16>
    %71 = vector.shape_cast %70 : vector<1x8x4xbf16> to vector<8x4xbf16>
    %72 = arith.truncf %69 : vector<4x64xf32> to vector<4x64xbf16>
    %cst_65 = arith.constant dense<0.000000e+00> : vector<8x64xf32>
    %73 = tpu.matmul %71, %72, %cst_65 {dimension_numbers = #tpu.dot_dimension_numbers<[1], [0], [0], [1], [0, 0, 1, 1], [], []>} : vector<8x4xbf16>, vector<4x64xbf16>, vector<8x64xf32> -> vector<8x64xf32>
    %74 = arith.addf %66, %73 : vector<8x64xf32>
    %c0_66 = arith.constant 0 : index
    %c0_67 = arith.constant 0 : index
    %75 = vector.load %arg4[%c0_66, %c0_67] : memref<8x1xf32, #tpu.memory_space<vmem>>, vector<8x1xf32>
    %76 = vector.broadcast %75 : vector<8x1xf32> to vector<8x64xf32>
    %77 = arith.addf %74, %76 : vector<8x64xf32>
    %cst_68 = arith.constant 0.000000e+00 : f32
    %78 = vector.broadcast %cst_68 : f32 to vector<8x64xf32>
    %79 = arith.maximumf %77, %78 : vector<8x64xf32>
    %80 = arith.truncf %79 : vector<8x64xf32> to vector<8x64xbf16>
    %cst_69 = arith.constant 0.000000e+00 : f32
    %81 = vector.broadcast %cst_69 : f32 to vector<16x16xf32>
    %c0_70 = arith.constant 0 : index
    %c0_71 = arith.constant 0 : index
    %c0_72 = arith.constant 0 : index
    %82 = vector.load %arg5[%c0_70, %c0_71, %c0_72] : memref<9x64x16xbf16, #tpu.memory_space<vmem>>, vector<1x64x16xbf16>
    %83 = vector.shape_cast %82 : vector<1x64x16xbf16> to vector<64x16xbf16>
    %cst_73 = arith.constant dense<0.000000e+00> : vector<8x16xf32>
    %84 = tpu.matmul %80, %83, %cst_73 {dimension_numbers = #tpu.dot_dimension_numbers<[1], [0], [0], [1], [0, 0, 1, 1], [], []>} : vector<8x64xbf16>, vector<64x16xbf16>, vector<8x16xf32> -> vector<8x16xf32>
    %c0_74 = arith.constant 0 : index
    %c0_75 = arith.constant 0 : index
    %c0_76 = arith.constant 0 : index
    %85 = vector.load %arg6[%c0_74, %c0_75, %c0_76] : memref<9x16x8xbf16, #tpu.memory_space<vmem>>, vector<1x16x8xbf16>
    %86 = vector.shape_cast %85 : vector<1x16x8xbf16> to vector<16x8xbf16>
    %87 = arith.truncf %84 : vector<8x16xf32> to vector<8x16xbf16>
    %cst_77 = arith.constant dense<0.000000e+00> : vector<16x16xf32>
    %88 = tpu.matmul %86, %87, %cst_77 {dimension_numbers = #tpu.dot_dimension_numbers<[1], [0], [0], [1], [0, 0, 1, 1], [], []>} : vector<16x8xbf16>, vector<8x16xbf16>, vector<16x16xf32> -> vector<16x16xf32>
    %89 = arith.addf %81, %88 : vector<16x16xf32>
    %c1_78 = arith.constant 1 : index
    %c0_79 = arith.constant 0 : index
    %c0_80 = arith.constant 0 : index
    %90 = vector.load %arg5[%c1_78, %c0_79, %c0_80] : memref<9x64x16xbf16, #tpu.memory_space<vmem>>, vector<1x64x16xbf16>
    %91 = vector.shape_cast %90 : vector<1x64x16xbf16> to vector<64x16xbf16>
    %cst_81 = arith.constant dense<0.000000e+00> : vector<8x16xf32>
    %92 = tpu.matmul %80, %91, %cst_81 {dimension_numbers = #tpu.dot_dimension_numbers<[1], [0], [0], [1], [0, 0, 1, 1], [], []>} : vector<8x64xbf16>, vector<64x16xbf16>, vector<8x16xf32> -> vector<8x16xf32>
    %c1_82 = arith.constant 1 : index
    %c0_83 = arith.constant 0 : index
    %c0_84 = arith.constant 0 : index
    %93 = vector.load %arg6[%c1_82, %c0_83, %c0_84] : memref<9x16x8xbf16, #tpu.memory_space<vmem>>, vector<1x16x8xbf16>
    %94 = vector.shape_cast %93 : vector<1x16x8xbf16> to vector<16x8xbf16>
    %95 = arith.truncf %92 : vector<8x16xf32> to vector<8x16xbf16>
    %cst_85 = arith.constant dense<0.000000e+00> : vector<16x16xf32>
    %96 = tpu.matmul %94, %95, %cst_85 {dimension_numbers = #tpu.dot_dimension_numbers<[1], [0], [0], [1], [0, 0, 1, 1], [], []>} : vector<16x8xbf16>, vector<8x16xbf16>, vector<16x16xf32> -> vector<16x16xf32>
    %97 = arith.addf %89, %96 : vector<16x16xf32>
    %c2_86 = arith.constant 2 : index
    %c0_87 = arith.constant 0 : index
    %c0_88 = arith.constant 0 : index
    %98 = vector.load %arg5[%c2_86, %c0_87, %c0_88] : memref<9x64x16xbf16, #tpu.memory_space<vmem>>, vector<1x64x16xbf16>
    %99 = vector.shape_cast %98 : vector<1x64x16xbf16> to vector<64x16xbf16>
    %cst_89 = arith.constant dense<0.000000e+00> : vector<8x16xf32>
    %100 = tpu.matmul %80, %99, %cst_89 {dimension_numbers = #tpu.dot_dimension_numbers<[1], [0], [0], [1], [0, 0, 1, 1], [], []>} : vector<8x64xbf16>, vector<64x16xbf16>, vector<8x16xf32> -> vector<8x16xf32>
    %c2_90 = arith.constant 2 : index
    %c0_91 = arith.constant 0 : index
    %c0_92 = arith.constant 0 : index
    %101 = vector.load %arg6[%c2_90, %c0_91, %c0_92] : memref<9x16x8xbf16, #tpu.memory_space<vmem>>, vector<1x16x8xbf16>
    %102 = vector.shape_cast %101 : vector<1x16x8xbf16> to vector<16x8xbf16>
    %103 = arith.truncf %100 : vector<8x16xf32> to vector<8x16xbf16>
    %cst_93 = arith.constant dense<0.000000e+00> : vector<16x16xf32>
    %104 = tpu.matmul %102, %103, %cst_93 {dimension_numbers = #tpu.dot_dimension_numbers<[1], [0], [0], [1], [0, 0, 1, 1], [], []>} : vector<16x8xbf16>, vector<8x16xbf16>, vector<16x16xf32> -> vector<16x16xf32>
    %105 = arith.addf %97, %104 : vector<16x16xf32>
    %c3_94 = arith.constant 3 : index
    %c0_95 = arith.constant 0 : index
    %c0_96 = arith.constant 0 : index
    %106 = vector.load %arg5[%c3_94, %c0_95, %c0_96] : memref<9x64x16xbf16, #tpu.memory_space<vmem>>, vector<1x64x16xbf16>
    %107 = vector.shape_cast %106 : vector<1x64x16xbf16> to vector<64x16xbf16>
    %cst_97 = arith.constant dense<0.000000e+00> : vector<8x16xf32>
    %108 = tpu.matmul %80, %107, %cst_97 {dimension_numbers = #tpu.dot_dimension_numbers<[1], [0], [0], [1], [0, 0, 1, 1], [], []>} : vector<8x64xbf16>, vector<64x16xbf16>, vector<8x16xf32> -> vector<8x16xf32>
    %c3_98 = arith.constant 3 : index
    %c0_99 = arith.constant 0 : index
    %c0_100 = arith.constant 0 : index
    %109 = vector.load %arg6[%c3_98, %c0_99, %c0_100] : memref<9x16x8xbf16, #tpu.memory_space<vmem>>, vector<1x16x8xbf16>
    %110 = vector.shape_cast %109 : vector<1x16x8xbf16> to vector<16x8xbf16>
    %111 = arith.truncf %108 : vector<8x16xf32> to vector<8x16xbf16>
    %cst_101 = arith.constant dense<0.000000e+00> : vector<16x16xf32>
    %112 = tpu.matmul %110, %111, %cst_101 {dimension_numbers = #tpu.dot_dimension_numbers<[1], [0], [0], [1], [0, 0, 1, 1], [], []>} : vector<16x8xbf16>, vector<8x16xbf16>, vector<16x16xf32> -> vector<16x16xf32>
    %113 = arith.addf %105, %112 : vector<16x16xf32>
    %c4_102 = arith.constant 4 : index
    %c0_103 = arith.constant 0 : index
    %c0_104 = arith.constant 0 : index
    %114 = vector.load %arg5[%c4_102, %c0_103, %c0_104] : memref<9x64x16xbf16, #tpu.memory_space<vmem>>, vector<1x64x16xbf16>
    %115 = vector.shape_cast %114 : vector<1x64x16xbf16> to vector<64x16xbf16>
    %cst_105 = arith.constant dense<0.000000e+00> : vector<8x16xf32>
    %116 = tpu.matmul %80, %115, %cst_105 {dimension_numbers = #tpu.dot_dimension_numbers<[1], [0], [0], [1], [0, 0, 1, 1], [], []>} : vector<8x64xbf16>, vector<64x16xbf16>, vector<8x16xf32> -> vector<8x16xf32>
    %c4_106 = arith.constant 4 : index
    %c0_107 = arith.constant 0 : index
    %c0_108 = arith.constant 0 : index
    %117 = vector.load %arg6[%c4_106, %c0_107, %c0_108] : memref<9x16x8xbf16, #tpu.memory_space<vmem>>, vector<1x16x8xbf16>
    %118 = vector.shape_cast %117 : vector<1x16x8xbf16> to vector<16x8xbf16>
    %119 = arith.truncf %116 : vector<8x16xf32> to vector<8x16xbf16>
    %cst_109 = arith.constant dense<0.000000e+00> : vector<16x16xf32>
    %120 = tpu.matmul %118, %119, %cst_109 {dimension_numbers = #tpu.dot_dimension_numbers<[1], [0], [0], [1], [0, 0, 1, 1], [], []>} : vector<16x8xbf16>, vector<8x16xbf16>, vector<16x16xf32> -> vector<16x16xf32>
    %121 = arith.addf %113, %120 : vector<16x16xf32>
    %c5_110 = arith.constant 5 : index
    %c0_111 = arith.constant 0 : index
    %c0_112 = arith.constant 0 : index
    %122 = vector.load %arg5[%c5_110, %c0_111, %c0_112] : memref<9x64x16xbf16, #tpu.memory_space<vmem>>, vector<1x64x16xbf16>
    %123 = vector.shape_cast %122 : vector<1x64x16xbf16> to vector<64x16xbf16>
    %cst_113 = arith.constant dense<0.000000e+00> : vector<8x16xf32>
    %124 = tpu.matmul %80, %123, %cst_113 {dimension_numbers = #tpu.dot_dimension_numbers<[1], [0], [0], [1], [0, 0, 1, 1], [], []>} : vector<8x64xbf16>, vector<64x16xbf16>, vector<8x16xf32> -> vector<8x16xf32>
    %c5_114 = arith.constant 5 : index
    %c0_115 = arith.constant 0 : index
    %c0_116 = arith.constant 0 : index
    %125 = vector.load %arg6[%c5_114, %c0_115, %c0_116] : memref<9x16x8xbf16, #tpu.memory_space<vmem>>, vector<1x16x8xbf16>
    %126 = vector.shape_cast %125 : vector<1x16x8xbf16> to vector<16x8xbf16>
    %127 = arith.truncf %124 : vector<8x16xf32> to vector<8x16xbf16>
    %cst_117 = arith.constant dense<0.000000e+00> : vector<16x16xf32>
    %128 = tpu.matmul %126, %127, %cst_117 {dimension_numbers = #tpu.dot_dimension_numbers<[1], [0], [0], [1], [0, 0, 1, 1], [], []>} : vector<16x8xbf16>, vector<8x16xbf16>, vector<16x16xf32> -> vector<16x16xf32>
    %129 = arith.addf %121, %128 : vector<16x16xf32>
    %c6_118 = arith.constant 6 : index
    %c0_119 = arith.constant 0 : index
    %c0_120 = arith.constant 0 : index
    %130 = vector.load %arg5[%c6_118, %c0_119, %c0_120] : memref<9x64x16xbf16, #tpu.memory_space<vmem>>, vector<1x64x16xbf16>
    %131 = vector.shape_cast %130 : vector<1x64x16xbf16> to vector<64x16xbf16>
    %cst_121 = arith.constant dense<0.000000e+00> : vector<8x16xf32>
    %132 = tpu.matmul %80, %131, %cst_121 {dimension_numbers = #tpu.dot_dimension_numbers<[1], [0], [0], [1], [0, 0, 1, 1], [], []>} : vector<8x64xbf16>, vector<64x16xbf16>, vector<8x16xf32> -> vector<8x16xf32>
    %c6_122 = arith.constant 6 : index
    %c0_123 = arith.constant 0 : index
    %c0_124 = arith.constant 0 : index
    %133 = vector.load %arg6[%c6_122, %c0_123, %c0_124] : memref<9x16x8xbf16, #tpu.memory_space<vmem>>, vector<1x16x8xbf16>
    %134 = vector.shape_cast %133 : vector<1x16x8xbf16> to vector<16x8xbf16>
    %135 = arith.truncf %132 : vector<8x16xf32> to vector<8x16xbf16>
    %cst_125 = arith.constant dense<0.000000e+00> : vector<16x16xf32>
    %136 = tpu.matmul %134, %135, %cst_125 {dimension_numbers = #tpu.dot_dimension_numbers<[1], [0], [0], [1], [0, 0, 1, 1], [], []>} : vector<16x8xbf16>, vector<8x16xbf16>, vector<16x16xf32> -> vector<16x16xf32>
    %137 = arith.addf %129, %136 : vector<16x16xf32>
    %c7_126 = arith.constant 7 : index
    %c0_127 = arith.constant 0 : index
    %c0_128 = arith.constant 0 : index
    %138 = vector.load %arg5[%c7_126, %c0_127, %c0_128] : memref<9x64x16xbf16, #tpu.memory_space<vmem>>, vector<1x64x16xbf16>
    %139 = vector.shape_cast %138 : vector<1x64x16xbf16> to vector<64x16xbf16>
    %cst_129 = arith.constant dense<0.000000e+00> : vector<8x16xf32>
    %140 = tpu.matmul %80, %139, %cst_129 {dimension_numbers = #tpu.dot_dimension_numbers<[1], [0], [0], [1], [0, 0, 1, 1], [], []>} : vector<8x64xbf16>, vector<64x16xbf16>, vector<8x16xf32> -> vector<8x16xf32>
    %c7_130 = arith.constant 7 : index
    %c0_131 = arith.constant 0 : index
    %c0_132 = arith.constant 0 : index
    %141 = vector.load %arg6[%c7_130, %c0_131, %c0_132] : memref<9x16x8xbf16, #tpu.memory_space<vmem>>, vector<1x16x8xbf16>
    %142 = vector.shape_cast %141 : vector<1x16x8xbf16> to vector<16x8xbf16>
    %143 = arith.truncf %140 : vector<8x16xf32> to vector<8x16xbf16>
    %cst_133 = arith.constant dense<0.000000e+00> : vector<16x16xf32>
    %144 = tpu.matmul %142, %143, %cst_133 {dimension_numbers = #tpu.dot_dimension_numbers<[1], [0], [0], [1], [0, 0, 1, 1], [], []>} : vector<16x8xbf16>, vector<8x16xbf16>, vector<16x16xf32> -> vector<16x16xf32>
    %145 = arith.addf %137, %144 : vector<16x16xf32>
    %c8_134 = arith.constant 8 : index
    %c0_135 = arith.constant 0 : index
    %c0_136 = arith.constant 0 : index
    %146 = vector.load %arg5[%c8_134, %c0_135, %c0_136] : memref<9x64x16xbf16, #tpu.memory_space<vmem>>, vector<1x64x16xbf16>
    %147 = vector.shape_cast %146 : vector<1x64x16xbf16> to vector<64x16xbf16>
    %cst_137 = arith.constant dense<0.000000e+00> : vector<8x16xf32>
    %148 = tpu.matmul %80, %147, %cst_137 {dimension_numbers = #tpu.dot_dimension_numbers<[1], [0], [0], [1], [0, 0, 1, 1], [], []>} : vector<8x64xbf16>, vector<64x16xbf16>, vector<8x16xf32> -> vector<8x16xf32>
    %c8_138 = arith.constant 8 : index
    %c0_139 = arith.constant 0 : index
    %c0_140 = arith.constant 0 : index
    %149 = vector.load %arg6[%c8_138, %c0_139, %c0_140] : memref<9x16x8xbf16, #tpu.memory_space<vmem>>, vector<1x16x8xbf16>
    %150 = vector.shape_cast %149 : vector<1x16x8xbf16> to vector<16x8xbf16>
    %151 = arith.truncf %148 : vector<8x16xf32> to vector<8x16xbf16>
    %cst_141 = arith.constant dense<0.000000e+00> : vector<16x16xf32>
    %152 = tpu.matmul %150, %151, %cst_141 {dimension_numbers = #tpu.dot_dimension_numbers<[1], [0], [0], [1], [0, 0, 1, 1], [], []>} : vector<16x8xbf16>, vector<8x16xbf16>, vector<16x16xf32> -> vector<16x16xf32>
    %153 = arith.addf %145, %152 : vector<16x16xf32>
    %c0_142 = arith.constant 0 : index
    %c0_143 = arith.constant 0 : index
    %154 = vector.load %arg7[%c0_142, %c0_143] : memref<16x1xf32, #tpu.memory_space<vmem>>, vector<16x1xf32>
    %155 = vector.broadcast %154 : vector<16x1xf32> to vector<16x16xf32>
    %156 = arith.addf %153, %155 : vector<16x16xf32>
    %cst_144 = arith.constant 0.000000e+00 : f32
    %157 = vector.broadcast %cst_144 : f32 to vector<16x16xf32>
    %158 = arith.maximumf %156, %157 : vector<16x16xf32>
    %c0_145 = arith.constant 0 : index
    %c0_146 = arith.constant 0 : index
    %159 = vector.load %arg8[%c0_145, %c0_146] : memref<3x16xbf16, #tpu.memory_space<vmem>>, vector<3x16xbf16>
    %160 = arith.truncf %158 : vector<16x16xf32> to vector<16x16xbf16>
    %cst_147 = arith.constant dense<0.000000e+00> : vector<3x16xf32>
    %161 = tpu.matmul %159, %160, %cst_147 {dimension_numbers = #tpu.dot_dimension_numbers<[1], [0], [0], [1], [0, 0, 1, 1], [], []>} : vector<3x16xbf16>, vector<16x16xbf16>, vector<3x16xf32> -> vector<3x16xf32>
    %c0_148 = arith.constant 0 : index
    %c0_149 = arith.constant 0 : index
    %162 = vector.load %arg9[%c0_148, %c0_149] : memref<3x1xf32, #tpu.memory_space<vmem>>, vector<3x1xf32>
    %163 = vector.broadcast %162 : vector<3x1xf32> to vector<3x16xf32>
    %164 = arith.addf %161, %163 : vector<3x16xf32>
    %165 = arith.truncf %164 : vector<3x16xf32> to vector<3x16xbf16>
    %c0_150 = arith.constant 0 : index
    %c0_151 = arith.constant 0 : index
    %166 = vector.load %arg10[%c0_150, %c0_151] : memref<16x64xbf16, #tpu.memory_space<vmem>>, vector<16x64xbf16>
    %cst_152 = arith.constant dense<0.000000e+00> : vector<3x64xf32>
    %167 = tpu.matmul %165, %166, %cst_152 {dimension_numbers = #tpu.dot_dimension_numbers<[1], [0], [0], [1], [0, 0, 1, 1], [], []>} : vector<3x16xbf16>, vector<16x64xbf16>, vector<3x64xf32> -> vector<3x64xf32>
    %168 = arith.truncf %167 : vector<3x64xf32> to vector<3x64xbf16>
    %c0_153 = arith.constant 0 : index
    %c0_154 = arith.constant 0 : index
    %169 = vector.load %arg11[%c0_153, %c0_154] : memref<64x256xbf16, #tpu.memory_space<vmem>>, vector<64x256xbf16>
    %cst_155 = arith.constant dense<0.000000e+00> : vector<3x256xf32>
    %170 = tpu.matmul %168, %169, %cst_155 {dimension_numbers = #tpu.dot_dimension_numbers<[1], [0], [0], [1], [0, 0, 1, 1], [], []>} : vector<3x64xbf16>, vector<64x256xbf16>, vector<3x256xf32> -> vector<3x256xf32>
    %c0_156 = arith.constant 0 : index
    %c0_157 = arith.constant 0 : index
    %c0_158 = arith.constant 0 : index
    %171 = vector.load %arg12[%c0_156, %c0_157, %c0_158] : memref<1x3x256xf32, #tpu.memory_space<vmem>>, vector<1x3x256xf32>
    %172 = vector.shape_cast %171 : vector<1x3x256xf32> to vector<3x256xf32>
    %173 = vector.shape_cast %170 : vector<3x256xf32> to vector<1x3x256xf32>
    tpu.vector_store %arg12[%c0_156, %c0_157, %c0_158], %173 {strides = array<i32>} : memref<1x3x256xf32, #tpu.memory_space<vmem>>, vector<1x3x256xf32>,
    return
  }
  func.func @transform_0(%arg0: i32) -> (i32, i32, i32) {
    %c0_i32 = arith.constant 0 : i32
    %c0_i32_0 = arith.constant 0 : i32
    %c0_i32_1 = arith.constant 0 : i32
    return %arg0, %c0_i32, %c0_i32_0 : i32, i32, i32
  }
  func.func @transform_1(%arg0: i32) -> (i32, i32, i32) {
    %c0_i32 = arith.constant 0 : i32
    %c0_i32_0 = arith.constant 0 : i32
    %c0_i32_1 = arith.constant 0 : i32
    %c0_i32_2 = arith.constant 0 : i32
    return %c0_i32, %c0_i32_0, %c0_i32_1 : i32, i32, i32
  }
  func.func @transform_2(%arg0: i32) -> (i32, i32, i32) {
    %c0_i32 = arith.constant 0 : i32
    %c0_i32_0 = arith.constant 0 : i32
    %c0_i32_1 = arith.constant 0 : i32
    %c0_i32_2 = arith.constant 0 : i32
    return %c0_i32, %c0_i32_0, %c0_i32_1 : i32, i32, i32
  }
  func.func @transform_3(%arg0: i32) -> (i32, i32) {
    %c0_i32 = arith.constant 0 : i32
    %c0_i32_0 = arith.constant 0 : i32
    %c0_i32_1 = arith.constant 0 : i32
    return %c0_i32, %c0_i32_0 : i32, i32
  }
  func.func @transform_4(%arg0: i32) -> (i32, i32, i32) {
    %c0_i32 = arith.constant 0 : i32
    %c0_i32_0 = arith.constant 0 : i32
    %c0_i32_1 = arith.constant 0 : i32
    %c0_i32_2 = arith.constant 0 : i32
    return %c0_i32, %c0_i32_0, %c0_i32_1 : i32, i32, i32
  }
  func.func @transform_5(%arg0: i32) -> (i32, i32, i32) {
    %c0_i32 = arith.constant 0 : i32
    %c0_i32_0 = arith.constant 0 : i32
    %c0_i32_1 = arith.constant 0 : i32
    %c0_i32_2 = arith.constant 0 : i32
    return %c0_i32, %c0_i32_0, %c0_i32_1 : i32, i32, i32
  }
  func.func @transform_6(%arg0: i32) -> (i32, i32) {
    %c0_i32 = arith.constant 0 : i32
    %c0_i32_0 = arith.constant 0 : i32
    %c0_i32_1 = arith.constant 0 : i32
    return %c0_i32, %c0_i32_0 : i32, i32
  }
  func.func @transform_7(%arg0: i32) -> (i32, i32) {
    %c0_i32 = arith.constant 0 : i32
    %c0_i32_0 = arith.constant 0 : i32
    %c0_i32_1 = arith.constant 0 : i32
    return %c0_i32, %c0_i32_0 : i32, i32
  }
  func.func @transform_8(%arg0: i32) -> (i32, i32) {
    %c0_i32 = arith.constant 0 : i32
    %c0_i32_0 = arith.constant 0 : i32
    %c0_i32_1 = arith.constant 0 : i32
    return %c0_i32, %c0_i32_0 : i32, i32
  }
  func.func @transform_9(%arg0: i32) -> (i32, i32) {
    %c0_i32 = arith.constant 0 : i32
    %c0_i32_0 = arith.constant 0 : i32
    %c0_i32_1 = arith.constant 0 : i32
    return %c0_i32, %c0_i32_0 : i32, i32
  }
  func.func @transform_10(%arg0: i32) -> (i32, i32) {
    %c0_i32 = arith.constant 0 : i32
    %c0_i32_0 = arith.constant 0 : i32
    %c0_i32_1 = arith.constant 0 : i32
    return %c0_i32, %c0_i32_0 : i32, i32
  }
  func.func @transform_11(%arg0: i32) -> (i32, i32, i32) {
    %c0_i32 = arith.constant 0 : i32
    %c0_i32_0 = arith.constant 0 : i32
    %c0_i32_1 = arith.constant 0 : i32
    return %arg0, %c0_i32, %c0_i32_0 : i32, i32, i32
  }
}

</mosaic_0001>

<llo_original>
// kernel: tpu_custom_call.1
$region0: #{tpu_custom_call.1}
  #allocation0 [shape = 'u32[]', space=smem, size = 0x4, offset = 0x4, fixed_abs, tag = 'smem constant byte address 0x4 - core index']
  #allocation1 [shape = 'u32[72,128]{1,0:T(1,128)}', space=vmem, size = 0x9000, scoped, tag = 'internal scratch']
  %s0 = inlined_call_operand.vmem [shape: bf16[2,4,256], index: 0, kind: input, shape index: {}]
  %s1 = inlined_call_operand.vmem [shape: bf16[9,256,64], index: 1, kind: input, shape index: {}]
  %s2 = inlined_call_operand.vmem [shape: bf16[9,8,4], index: 2, kind: input, shape index: {}]
  %s3 = inlined_call_operand.vmem [shape: f32[8,1], index: 3, kind: input, shape index: {}]
  %s4 = inlined_call_operand.vmem [shape: bf16[9,64,16], index: 4, kind: input, shape index: {}]
  %s5 = inlined_call_operand.vmem [shape: bf16[9,16,8], index: 5, kind: input, shape index: {}]
  %s6 = inlined_call_operand.vmem [shape: f32[16,1], index: 6, kind: input, shape index: {}]
  %s7 = inlined_call_operand.vmem [shape: bf16[3,16], index: 7, kind: input, shape index: {}]
  %s8 = inlined_call_operand.vmem [shape: f32[3,1], index: 8, kind: input, shape index: {}]
  %s9 = inlined_call_operand.vmem [shape: bf16[16,64], index: 9, kind: input, shape index: {}]
  %s10 = inlined_call_operand.vmem [shape: bf16[64,256], index: 10, kind: input, shape index: {}]
  %s11 = inlined_call_operand.vmem [shape: f32[2,3,256], index: 11, kind: output, shape index: {}]
  %s12 = sld [smem:[#allocation0]]
  $region77: #{tpu_custom_call.1} parent=0
    _
  %s14 = ssub.s32 1, %s12
  %s15 = scalar_select 0, %s14, %s12
  loop: start=0, step=1, limit=4
  $region2: #{tpu_custom_call.1} parent=0 // loop_pre_header
    _
  $region3: #{tpu_custom_call.1} parent=0 // loop_header
    %s17 = sphi 0, %s21
    %p18 = scmp.ge.s32.totalorder %s17, 4
    %s27 = sphi 0, %s29
    %s30 = sphi 0, %s27
    %s31 = sphi 0, %s30
    %s47 = sphi 0, %s31
    %s51 = sphi 0, %s51
    %s53 = sphi 0, %s51
    %s54 = sphi 0, %s53
    %s68 = sphi 0, %s54
    %s72 = sphi 0, %s72
    %s74 = sphi 0, %s72
    %s75 = sphi 0, %s74
    %s89 = sphi 0, %s75
    %s93 = sphi 0, %s93
    %s95 = sphi 0, %s93
    %s96 = sphi 0, %s95
    %s110 = sphi 0, %s96
    %s114 = sphi 0, %s114
    %s116 = sphi 0, %s114
    %s117 = sphi 0, %s116
    %s131 = sphi 0, %s117
    %s135 = sphi 0, %s135
    %s137 = sphi 0, %s135
    %s138 = sphi 0, %s137
    %s152 = sphi 0, %s138
    %s156 = sphi 0, %s156
    %s158 = sphi 0, %s156
    %s159 = sphi 0, %s158
    %s173 = sphi 0, %s159
    %s177 = sphi 0, %s177
    %s179 = sphi 0, %s177
    %s180 = sphi 0, %s179
    %s194 = sphi 0, %s180
    %s198 = sphi 0, %s198
    %s200 = sphi 0, %s198
    %s201 = sphi 0, %s200
    %s215 = sphi 0, %s201
    %s219 = sphi 0, %s219
    %s221 = sphi 0, %s219
    %s222 = sphi 0, %s221
    %s236 = sphi 0, %s222
    %s240 = sphi 0, %s240
    %s242 = sphi 0, %s240
    %s243 = sphi 0, %s242
    %s257 = sphi 0, %s243
    %s263 = sphi 0, %s265
    %s266 = sphi 0, %s263
    %s267 = sphi 0, %s266
    %s283 = sphi 0, %s267
  $region4: #{tpu_custom_call.1} parent=0 // loop_header_branch
    %20 = sbr.rel (%p18) target = $region8
  $region5: #{tpu_custom_call.1} parent=0 // loop_body
    %s22 = ssub.s32 %s17, 1
    %s23 = ssub.s32 %s17, 2
    %s24 = sadd.s32 %s17, 1
    %s25 = ssub.s32 %s17, %s24
    %p26 = scmp.eq.s32.totalorder %s25, 0
    %s28 = sadd.s32 %s27, 1
    %s29 = scalar_select %p26, %s27, %s28
    %p32 = pneg %p26
    %p33 = scmp.eq.s32.totalorder %s17, 1
    %p34 = por %p32, %p33
    %p35 = scmp.ne.s32.totalorder %s27, %s30
    %p36 = scmp.eq.s32.totalorder %s17, 0
    %p37 = por %p35, %p36
    %p38 = scmp.ne.s32.totalorder %s27, %s30
    %p39 = scmp.eq.s32.totalorder %s22, 1
    %p40 = por %p38, %p39
    %p41 = scmp.ne.s32.totalorder %s30, %s31
    %p42 = scmp.eq.s32.totalorder %s22, 0
    %p43 = por %p41, %p42
    %p44 = scmp.ne.s32.totalorder %s30, %s31
    %p45 = scmp.eq.s32.totalorder %s23, 1
    %p46 = por %p44, %p45
    %p48 = scmp.ne.s32.totalorder %s31, %s47
    %p49 = scmp.eq.s32.totalorder %s23, 0
    %p50 = por %p48, %p49
    %s52 = sadd.s32 %s51, 1
    %p55 = scmp.eq.s32.totalorder %s17, 1
    %p56 = scmp.ne.s32.totalorder %s51, %s53
    %p57 = scmp.eq.s32.totalorder %s17, 0
    %p58 = por %p56, %p57
    %p59 = scmp.ne.s32.totalorder %s51, %s53
    %p60 = scmp.eq.s32.totalorder %s22, 1
    %p61 = por %p59, %p60
    %p62 = scmp.ne.s32.totalorder %s53, %s54
    %p63 = scmp.eq.s32.totalorder %s22, 0
    %p64 = por %p62, %p63
    %p65 = scmp.ne.s32.totalorder %s53, %s54
    %p66 = scmp.eq.s32.totalorder %s23, 1
    %p67 = por %p65, %p66
    %p69 = scmp.ne.s32.totalorder %s54, %s68
    %p70 = scmp.eq.s32.totalorder %s23, 0
    %p71 = por %p69, %p70
    %s73 = sadd.s32 %s72, 1
    %p76 = scmp.eq.s32.totalorder %s17, 1
    %p77 = scmp.ne.s32.totalorder %s72, %s74
    %p78 = scmp.eq.s32.totalorder %s17, 0
    %p79 = por %p77, %p78
    %p80 = scmp.ne.s32.totalorder %s72, %s74
    %p81 = scmp.eq.s32.totalorder %s22, 1
    %p82 = por %p80, %p81
    %p83 = scmp.ne.s32.totalorder %s74, %s75
    %p84 = scmp.eq.s32.totalorder %s22, 0
    %p85 = por %p83, %p84
    %p86 = scmp.ne.s32.totalorder %s74, %s75
    %p87 = scmp.eq.s32.totalorder %s23, 1
    %p88 = por %p86, %p87
    %p90 = scmp.ne.s32.totalorder %s75, %s89
    %p91 = scmp.eq.s32.totalorder %s23, 0
    %p92 = por %p90, %p91
    %s94 = sadd.s32 %s93, 1
    %p97 = scmp.eq.s32.totalorder %s17, 1
    %p98 = scmp.ne.s32.totalorder %s93, %s95
    %p99 = scmp.eq.s32.totalorder %s17, 0
    %p100 = por %p98, %p99
    %p101 = scmp.ne.s32.totalorder %s93, %s95
    %p102 = scmp.eq.s32.totalorder %s22, 1
    %p103 = por %p101, %p102
    %p104 = scmp.ne.s32.totalorder %s95, %s96
    %p105 = scmp.eq.s32.totalorder %s22, 0
    %p106 = por %p104, %p105
    %p107 = scmp.ne.s32.totalorder %s95, %s96
    %p108 = scmp.eq.s32.totalorder %s23, 1
    %p109 = por %p107, %p108
    %p111 = scmp.ne.s32.totalorder %s96, %s110
    %p112 = scmp.eq.s32.totalorder %s23, 0
    %p113 = por %p111, %p112
    %s115 = sadd.s32 %s114, 1
    %p118 = scmp.eq.s32.totalorder %s17, 1
    %p119 = scmp.ne.s32.totalorder %s114, %s116
    %p120 = scmp.eq.s32.totalorder %s17, 0
    %p121 = por %p119, %p120
    %p122 = scmp.ne.s32.totalorder %s114, %s116
    %p123 = scmp.eq.s32.totalorder %s22, 1
    %p124 = por %p122, %p123
    %p125 = scmp.ne.s32.totalorder %s116, %s117
    %p126 = scmp.eq.s32.totalorder %s22, 0
    %p127 = por %p125, %p126
    %p128 = scmp.ne.s32.totalorder %s116, %s117
    %p129 = scmp.eq.s32.totalorder %s23, 1
    %p130 = por %p128, %p129
    %p132 = scmp.ne.s32.totalorder %s117, %s131
    %p133 = scmp.eq.s32.totalorder %s23, 0
    %p134 = por %p132, %p133
    %s136 = sadd.s32 %s135, 1
    %p139 = scmp.eq.s32.totalorder %s17, 1
    %p140 = scmp.ne.s32.totalorder %s135, %s137
    %p141 = scmp.eq.s32.totalorder %s17, 0
    %p142 = por %p140, %p141
    %p143 = scmp.ne.s32.totalorder %s135, %s137
    %p144 = scmp.eq.s32.totalorder %s22, 1
    %p145 = por %p143, %p144
    %p146 = scmp.ne.s32.totalorder %s137, %s138
    %p147 = scmp.eq.s32.totalorder %s22, 0
    %p148 = por %p146, %p147
    %p149 = scmp.ne.s32.totalorder %s137, %s138
    %p150 = scmp.eq.s32.totalorder %s23, 1
    %p151 = por %p149, %p150
    %p153 = scmp.ne.s32.totalorder %s138, %s152
    %p154 = scmp.eq.s32.totalorder %s23, 0
    %p155 = por %p153, %p154
    %s157 = sadd.s32 %s156, 1
    %p160 = scmp.eq.s32.totalorder %s17, 1
    %p161 = scmp.ne.s32.totalorder %s156, %s158
    %p162 = scmp.eq.s32.totalorder %s17, 0
    %p163 = por %p161, %p162
    %p164 = scmp.ne.s32.totalorder %s156, %s158
    %p165 = scmp.eq.s32.totalorder %s22, 1
    %p166 = por %p164, %p165
    %p167 = scmp.ne.s32.totalorder %s158, %s159
    %p168 = scmp.eq.s32.totalorder %s22, 0
    %p169 = por %p167, %p168
    %p170 = scmp.ne.s32.totalorder %s158, %s159
    %p171 = scmp.eq.s32.totalorder %s23, 1
    %p172 = por %p170, %p171
    %p174 = scmp.ne.s32.totalorder %s159, %s173
    %p175 = scmp.eq.s32.totalorder %s23, 0
    %p176 = por %p174, %p175
    %s178 = sadd.s32 %s177, 1
    %p181 = scmp.eq.s32.totalorder %s17, 1
    %p182 = scmp.ne.s32.totalorder %s177, %s179
    %p183 = scmp.eq.s32.totalorder %s17, 0
    %p184 = por %p182, %p183
    %p185 = scmp.ne.s32.totalorder %s177, %s179
    %p186 = scmp.eq.s32.totalorder %s22, 1
    %p187 = por %p185, %p186
    %p188 = scmp.ne.s32.totalorder %s179, %s180
    %p189 = scmp.eq.s32.totalorder %s22, 0
    %p190 = por %p188, %p189
    %p191 = scmp.ne.s32.totalorder %s179, %s180
    %p192 = scmp.eq.s32.totalorder %s23, 1
    %p193 = por %p191, %p192
    %p195 = scmp.ne.s32.totalorder %s180, %s194
    %p196 = scmp.eq.s32.totalorder %s23, 0
    %p197 = por %p195, %p196
    %s199 = sadd.s32 %s198, 1
    %p202 = scmp.eq.s32.totalorder %s17, 1
    %p203 = scmp.ne.s32.totalorder %s198, %s200
    %p204 = scmp.eq.s32.totalorder %s17, 0
    %p205 = por %p203, %p204
    %p206 = scmp.ne.s32.totalorder %s198, %s200
    %p207 = scmp.eq.s32.totalorder %s22, 1
    %p208 = por %p206, %p207
    %p209 = scmp.ne.s32.totalorder %s200, %s201
    %p210 = scmp.eq.s32.totalorder %s22, 0
    %p211 = por %p209, %p210
    %p212 = scmp.ne.s32.totalorder %s200, %s201
    %p213 = scmp.eq.s32.totalorder %s23, 1
    %p214 = por %p212, %p213
    %p216 = scmp.ne.s32.totalorder %s201, %s215
    %p217 = scmp.eq.s32.totalorder %s23, 0
    %p218 = por %p216, %p217
    %s220 = sadd.s32 %s219, 1
    %p223 = scmp.eq.s32.totalorder %s17, 1
    %p224 = scmp.ne.s32.totalorder %s219, %s221
    %p225 = scmp.eq.s32.totalorder %s17, 0
    %p226 = por %p224, %p225
    %p227 = scmp.ne.s32.totalorder %s219, %s221
    %p228 = scmp.eq.s32.totalorder %s22, 1
    %p229 = por %p227, %p228
    %p230 = scmp.ne.s32.totalorder %s221, %s222
    %p231 = scmp.eq.s32.totalorder %s22, 0
    %p232 = por %p230, %p231
    %p233 = scmp.ne.s32.totalorder %s221, %s222
    %p234 = scmp.eq.s32.totalorder %s23, 1
    %p235 = por %p233, %p234
    %p237 = scmp.ne.s32.totalorder %s222, %s236
    %p238 = scmp.eq.s32.totalorder %s23, 0
    %p239 = por %p237, %p238
    %s241 = sadd.s32 %s240, 1
    %p244 = scmp.eq.s32.totalorder %s17, 1
    %p245 = scmp.ne.s32.totalorder %s240, %s242
    %p246 = scmp.eq.s32.totalorder %s17, 0
    %p247 = por %p245, %p246
    %p248 = scmp.ne.s32.totalorder %s240, %s242
    %p249 = scmp.eq.s32.totalorder %s22, 1
    %p250 = por %p248, %p249
    %p251 = scmp.ne.s32.totalorder %s242, %s243
    %p252 = scmp.eq.s32.totalorder %s22, 0
    %p253 = por %p251, %p252
    %p254 = scmp.ne.s32.totalorder %s242, %s243
    %p255 = scmp.eq.s32.totalorder %s23, 1
    %p256 = por %p254, %p255
    %p258 = scmp.ne.s32.totalorder %s243, %s257
    %p259 = scmp.eq.s32.totalorder %s23, 0
    %p260 = por %p258, %p259
    %s261 = ssub.s32 %s17, %s24
    %p262 = scmp.eq.s32.totalorder %s261, 0
    %s264 = sadd.s32 %s263, 1
    %s265 = scalar_select %p262, %s263, %s264
    %p268 = pneg %p262
    %p269 = scmp.eq.s32.totalorder %s17, 1
    %p270 = por %p268, %p269
    %p271 = scmp.ne.s32.totalorder %s263, %s266
    %p272 = scmp.eq.s32.totalorder %s17, 0
    %p273 = por %p271, %p272
    %p274 = scmp.ne.s32.totalorder %s263, %s266
    %p275 = scmp.eq.s32.totalorder %s22, 1
    %p276 = por %p274, %p275
    %p277 = scmp.ne.s32.totalorder %s266, %s267
    %p278 = scmp.eq.s32.totalorder %s22, 0
    %p279 = por %p277, %p278
    %p280 = scmp.ne.s32.totalorder %s266, %s267
    %p281 = scmp.eq.s32.totalorder %s23, 1
    %p282 = por %p280, %p281
    %p284 = scmp.ne.s32.totalorder %s267, %s283
    %p285 = scmp.eq.s32.totalorder %s23, 0
    %p286 = por %p284, %p285
    %p287 = scmp.le.s32.totalorder 1, %s17
    %p288 = scmp.lt.s32.totalorder %s17, 3
    %p289 = pnand %p287, %p288
    %p290 = pneg %p289
    // Predicated region
    $region9: #{tpu_custom_call.1} parent=5 // pred_check
      _
    $region10: #{tpu_custom_call.1} parent=5 // pred_check_branch
      %292 = sbr.rel (%p289) target = $region12
    $region11: #{tpu_custom_call.1} parent=5 // pred_region
      %s293 = ssub.s32 %s17, 1
      // Predicated region
      $region13: #{tpu_custom_call.1} parent=11 // pred_check
        %p294 = pneg %p64
      $region14: #{tpu_custom_call.1} parent=11 // pred_check_branch
        %296 = sbr.rel (%p294) target = $region16
      $region15: #{tpu_custom_call.1} parent=11 // pred_region
        _
      $region16: #{tpu_custom_call.1} parent=11 // pred_fallthru
        _
      // Predicated region
      $region17: #{tpu_custom_call.1} parent=11 // pred_check
        %p297 = pneg %p85
      $region18: #{tpu_custom_call.1} parent=11 // pred_check_branch
        %299 = sbr.rel (%p297) target = $region20
      $region19: #{tpu_custom_call.1} parent=11 // pred_region
        _
      $region20: #{tpu_custom_call.1} parent=11 // pred_fallthru
        _
      // Predicated region
      $region21: #{tpu_custom_call.1} parent=11 // pred_check
        %p300 = pneg %p106
      $region22: #{tpu_custom_call.1} parent=11 // pred_check_branch
        %302 = sbr.rel (%p300) target = $region24
      $region23: #{tpu_custom_call.1} parent=11 // pred_region
        _
      $region24: #{tpu_custom_call.1} parent=11 // pred_fallthru
        _
      // Predicated region
      $region25: #{tpu_custom_call.1} parent=11 // pred_check
        %p303 = pneg %p127
      $region26: #{tpu_custom_call.1} parent=11 // pred_check_branch
        %305 = sbr.rel (%p303) target = $region28
      $region27: #{tpu_custom_call.1} parent=11 // pred_region
        _
      $region28: #{tpu_custom_call.1} parent=11 // pred_fallthru
        _
      // Predicated region
      $region29: #{tpu_custom_call.1} parent=11 // pred_check
        %p306 = pneg %p148
      $region30: #{tpu_custom_call.1} parent=11 // pred_check_branch
        %308 = sbr.rel (%p306) target = $region32
      $region31: #{tpu_custom_call.1} parent=11 // pred_region
        _
      $region32: #{tpu_custom_call.1} parent=11 // pred_fallthru
        _
      // Predicated region
      $region33: #{tpu_custom_call.1} parent=11 // pred_check
        %p309 = pneg %p169
      $region34: #{tpu_custom_call.1} parent=11 // pred_check_branch
        %311 = sbr.rel (%p309) target = $region36
      $region35: #{tpu_custom_call.1} parent=11 // pred_region
        _
      $region36: #{tpu_custom_call.1} parent=11 // pred_fallthru
        _
      // Predicated region
      $region37: #{tpu_custom_call.1} parent=11 // pred_check
        %p312 = pneg %p190
      $region38: #{tpu_custom_call.1} parent=11 // pred_check_branch
        %314 = sbr.rel (%p312) target = $region40
      $region39: #{tpu_custom_call.1} parent=11 // pred_region
        _
      $region40: #{tpu_custom_call.1} parent=11 // pred_fallthru
        _
      // Predicated region
      $region41: #{tpu_custom_call.1} parent=11 // pred_check
        %p315 = pneg %p211
      $region42: #{tpu_custom_call.1} parent=11 // pred_check_branch
        %317 = sbr.rel (%p315) target = $region44
      $region43: #{tpu_custom_call.1} parent=11 // pred_region
        _
      $region44: #{tpu_custom_call.1} parent=11 // pred_fallthru
        _
      // Predicated region
      $region45: #{tpu_custom_call.1} parent=11 // pred_check
        %p318 = pneg %p232
      $region46: #{tpu_custom_call.1} parent=11 // pred_check_branch
        %320 = sbr.rel (%p318) target = $region48
      $region47: #{tpu_custom_call.1} parent=11 // pred_region
        _
      $region48: #{tpu_custom_call.1} parent=11 // pred_fallthru
        _
      // Predicated region
      $region49: #{tpu_custom_call.1} parent=11 // pred_check
        %p321 = pneg %p253
      $region50: #{tpu_custom_call.1} parent=11 // pred_check_branch
        %323 = sbr.rel (%p321) target = $region52
      $region51: #{tpu_custom_call.1} parent=11 // pred_region
        _
      $region52: #{tpu_custom_call.1} parent=11 // pred_fallthru
        _
    $region12: #{tpu_custom_call.1} parent=5 // pred_fallthru
      _
    %p324 = scmp.lt.s32.totalorder %s17, 2
    // Predicated region
    $region53: #{tpu_custom_call.1} parent=5 // pred_check
      %p325 = pneg %p324
    $region54: #{tpu_custom_call.1} parent=5 // pred_check_branch
      %327 = sbr.rel (%p325) target = $region56
    $region55: #{tpu_custom_call.1} parent=5 // pred_region
      // Predicated region
      $region57: #{tpu_custom_call.1} parent=55 // pred_check
        %p328 = pneg %p37
      $region58: #{tpu_custom_call.1} parent=55 // pred_check_branch
        %330 = sbr.rel (%p328) target = $region60
      $region59: #{tpu_custom_call.1} parent=55 // pred_region
        %p331 = scmp.lt.s32.totalorder %s17, 1
        %s332 = scalar_select %p331, %s17, 1
        %s333 = smul.addr %s332, 2
        %s334 = smul.addr %s333, 2
        %s335 = scalar_lea.vmem %s0, %s334
      $region60: #{tpu_custom_call.1} parent=55 // pred_fallthru
        _
    $region56: #{tpu_custom_call.1} parent=5 // pred_fallthru
      _
    %p336 = scmp.le.s32.totalorder 1, %s17
    %p337 = scmp.lt.s32.totalorder %s17, 3
    %p338 = pnand %p336, %p337
    %p339 = pneg %p338
    // Predicated region
    $region61: #{tpu_custom_call.1} parent=5 // pred_check
      _
    $region62: #{tpu_custom_call.1} parent=5 // pred_check_branch
      %341 = sbr.rel (%p338) target = $region64
    $region63: #{tpu_custom_call.1} parent=5 // pred_region
      %s342 = ssub.s32 %s17, 1
      %p343 = scmp.lt.s32.totalorder %s22, 1
      %s344 = scalar_select %p343, %s22, 1
      %s345 = smul.addr %s344, 2
      %s346 = smul.addr %s345, 2
      %s347 = scalar_lea.vmem %s0, %s346
      %p348 = pneg %p43
      %p349 = pneg %p40
      %p350 = pneg %p64
      %p351 = pneg %p61
      %p352 = pneg %p85
      %p353 = pneg %p82
      %p354 = pneg %p106
      %p355 = pneg %p103
      %p356 = pneg %p127
      %p357 = pneg %p124
      %p358 = pneg %p148
      %p359 = pneg %p145
      %p360 = pneg %p169
      %p361 = pneg %p166
      %p362 = pneg %p190
      %p363 = pneg %p187
      %p364 = pneg %p211
      %p365 = pneg %p208
      %p366 = pneg %p232
      %p367 = pneg %p229
      %p368 = pneg %p253
      %p369 = pneg %p250
      %p370 = pneg %p279
      %p371 = pneg %p276
      %p372 = scmp.lt.s32.totalorder %s22, 1
      %s373 = scalar_select %p372, %s22, 1
      %s374 = smul.addr %s373, 2
      %s375 = smul.addr %s374, 4
      %s376 = scalar_lea.vmem %s11, %s375
      %p377 = scmp.lt.s32.totalorder %s22, 1
      %s378 = scalar_select %p377, %s22, 1
      %s379 = smul.addr %s378, 2
      %s380 = smul.addr %s379, 2
      %s381 = scalar_lea.vmem %s0, %s380
      %p382 = scmp.lt.s32.totalorder %s22, 1
      %s383 = scalar_select %p382, %s22, 1
      %s384 = smul.addr %s383, 2
      %s385 = smul.addr %s384, 4
      %s386 = scalar_lea.vmem %s11, %s385
      %v388 = vld [vmem:[%s381] sm:$0xf]
      %v389 = vld [vmem:[%s1] sm:$0xf]
      %v390 = vld [vmem:[%s1 + $0x4] sm:$0xf]
      %v391 = vld [vmem:[%s1 + $0x8] sm:$0xf]
      %v392 = vld [vmem:[%s1 + $0xc] sm:$0xf]
      %v393 = vld [vmem:[%s1 + $0x10] sm:$0xf]
      %v394 = vld [vmem:[%s1 + $0x14] sm:$0xf]
      %v395 = vld [vmem:[%s1 + $0x18] sm:$0xf]
      %v396 = vld [vmem:[%s1 + $0x1c] sm:$0xf]
      %v397 = vld [vmem:[%s1 + $0x20] sm:$0xf]
      %v398 = vld [vmem:[%s1 + $0x24] sm:$0xf]
      %v399 = vld [vmem:[%s1 + $0x28] sm:$0xf]
      %v400 = vld [vmem:[%s1 + $0x2c] sm:$0xf]
      %v401 = vld [vmem:[%s1 + $0x30] sm:$0xf]
      %v402 = vld [vmem:[%s1 + $0x34] sm:$0xf]
      %v403 = vld [vmem:[%s1 + $0x38] sm:$0xf]
      %v404 = vld [vmem:[%s1 + $0x3c] sm:$0xf]
      %v405 = vld [vmem:[%s1 + $0x40] sm:$0xf]
      %v406 = vld [vmem:[%s1 + $0x44] sm:$0xf]
      %v407 = vld [vmem:[%s1 + $0x48] sm:$0xf]
      %v408 = vld [vmem:[%s1 + $0x4c] sm:$0xf]
      %v409 = vld [vmem:[%s1 + $0x50] sm:$0xf]
      %v410 = vld [vmem:[%s1 + $0x54] sm:$0xf]
      %v411 = vld [vmem:[%s1 + $0x58] sm:$0xf]
      %v412 = vld [vmem:[%s1 + $0x5c] sm:$0xf]
      %v413 = vld [vmem:[%s1 + $0x60] sm:$0xf]
      %v414 = vld [vmem:[%s1 + $0x64] sm:$0xf]
      %v415 = vld [vmem:[%s1 + $0x68] sm:$0xf]
      %v416 = vld [vmem:[%s1 + $0x6c] sm:$0xf]
      %v417 = vld [vmem:[%s1 + $0x70] sm:$0xf]
      %v418 = vld [vmem:[%s1 + $0x74] sm:$0xf]
      %v419 = vld [vmem:[%s1 + $0x78] sm:$0xf]
      %v420 = vld [vmem:[%s1 + $0x7c] sm:$0xf]
      %422 = vst [vmem:[#allocation1] ss:$4 sm:$0xff] %v388
      %v423 = vld.sshfl [vmem:[#allocation1] sm:$0xff pattern:$0x73625140]
      %v424 = vld.sshfl [vmem:[#allocation1 + $0x8] sm:$0xff pattern:$0x73625140]
      %v459 = vunpack.c.l.b16 %v389
      %v460 = vunpack.c.l.b16 %v390
      %v461 = vunpack.c.l.b16 %v391
      %v462 = vunpack.c.l.b16 %v392
      %v463 = vunpack.c.l.b16 %v393
      %v464 = vunpack.c.l.b16 %v394
      %v465 = vunpack.c.l.b16 %v395
      %v466 = vunpack.c.l.b16 %v396
      %v467 = vunpack.c.l.b16 %v397
      %v468 = vunpack.c.l.b16 %v398
      %v469 = vunpack.c.l.b16 %v399
      %v470 = vunpack.c.l.b16 %v400
      %v471 = vunpack.c.l.b16 %v401
      %v472 = vunpack.c.l.b16 %v402
      %v473 = vunpack.c.l.b16 %v403
      %v474 = vunpack.c.l.b16 %v404
      %v475 = vunpack.c.l.b16 %v405
      %v476 = vunpack.c.l.b16 %v406
      %v477 = vunpack.c.l.b16 %v407
      %v478 = vunpack.c.l.b16 %v408
      %v479 = vunpack.c.l.b16 %v409
      %v480 = vunpack.c.l.b16 %v410
      %v481 = vunpack.c.l.b16 %v411
      %v482 = vunpack.c.l.b16 %v412
      %v483 = vunpack.c.l.b16 %v413
      %v484 = vunpack.c.l.b16 %v414
      %v485 = vunpack.c.l.b16 %v415
      %v486 = vunpack.c.l.b16 %v416
      %v487 = vunpack.c.l.b16 %v417
      %v488 = vunpack.c.l.b16 %v418
      %v489 = vunpack.c.l.b16 %v419
      %v490 = vunpack.c.l.b16 %v420
      %v491 = vpack.c.b16 %v460, %v459
      %v492 = vpack.c.b16 %v462, %v461
      %v493 = vpack.c.b16 %v464, %v463
      %v494 = vpack.c.b16 %v466, %v465
      %v495 = vpack.c.b16 %v468, %v467
      %v496 = vpack.c.b16 %v470, %v469
      %v497 = vpack.c.b16 %v472, %v471
      %v498 = vpack.c.b16 %v474, %v473
      %v499 = vpack.c.b16 %v476, %v475
      %v500 = vpack.c.b16 %v478, %v477
      %v501 = vpack.c.b16 %v480, %v479
      %v502 = vpack.c.b16 %v482, %v481
      %v503 = vpack.c.b16 %v484, %v483
      %v504 = vpack.c.b16 %v486, %v485
      %v505 = vpack.c.b16 %v488, %v487
      %v506 = vpack.c.b16 %v490, %v489
      %523 = vmatpush.bf16.msra.mxu0 %v498
      %524 = vmatpush.bf16.msra.mxu0 %v497
      %525 = vmatpush.bf16.msra.mxu0 %v496
      %526 = vmatpush.bf16.msra.mxu0 %v495
      %527 = vmatpush.bf16.msra.mxu0 %v494
      %528 = vmatpush.bf16.msra.mxu0 %v493
      %529 = vmatpush.bf16.msra.mxu0 %v492
      %530 = vmatpush.bf16.msra.mxu0 %v491
      %531 = vmatmul.bf16.gmra.mxu0 %v423
      %v532 = vpop.f32.mrf.mxu0
      %v533 = vadd.f32 0.0, %v532
      %v534 = vpop.f32.mrf.mxu0
      %535 = vdwg.mxu0
      %536 = vmatpush.bf16.msra.mxu0 %v506
      %537 = vmatpush.bf16.msra.mxu0 %v505
      %538 = vmatpush.bf16.msra.mxu0 %v504
      %539 = vmatpush.bf16.msra.mxu0 %v503
      %540 = vmatpush.bf16.msra.mxu0 %v502
      %541 = vmatpush.bf16.msra.mxu0 %v501
      %542 = vmatpush.bf16.msra.mxu0 %v500
      %543 = vmatpush.bf16.msra.mxu0 %v499
      %544 = vmatmul.bf16.gmra.mxu0 %v424
      %v545 = vpop.f32.mrf.mxu0
      %v546 = vadd.f32 %v533, %v545
      %v547 = vpop.f32.mrf.mxu0
      %548 = vdwg.mxu0
      %v549 = vld [vmem:[%s2] sm:$0xf]
      %v550 = vpack.c.bf16 %v546, %v546
      %s551 = scalar_lea.vmem %s1, 128
      %v552 = vld [vmem:[%s551] sm:$0xf]
      %v553 = vld [vmem:[%s551 + $0x4] sm:$0xf]
      %v554 = vld [vmem:[%s551 + $0x8] sm:$0xf]
      %v555 = vld [vmem:[%s551 + $0xc] sm:$0xf]
      %v556 = vld [vmem:[%s551 + $0x10] sm:$0xf]
      %v557 = vld [vmem:[%s551 + $0x14] sm:$0xf]
      %v558 = vld [vmem:[%s551 + $0x18] sm:$0xf]
      %v559 = vld [vmem:[%s551 + $0x1c] sm:$0xf]
      %v560 = vld [vmem:[%s551 + $0x20] sm:$0xf]
      %v561 = vld [vmem:[%s551 + $0x24] sm:$0xf]
      %v562 = vld [vmem:[%s551 + $0x28] sm:$0xf]
      %v563 = vld [vmem:[%s551 + $0x2c] sm:$0xf]
      %v564 = vld [vmem:[%s551 + $0x30] sm:$0xf]
      %v565 = vld [vmem:[%s551 + $0x34] sm:$0xf]
      %v566 = vld [vmem:[%s551 + $0x38] sm:$0xf]
      %v567 = vld [vmem:[%s551 + $0x3c] sm:$0xf]
      %v568 = vld [vmem:[%s551 + $0x40] sm:$0xf]
      %v569 = vld [vmem:[%s551 + $0x44] sm:$0xf]
      %v570 = vld [vmem:[%s551 + $0x48] sm:$0xf]
      %v571 = vld [vmem:[%s551 + $0x4c] sm:$0xf]
      %v572 = vld [vmem:[%s551 + $0x50] sm:$0xf]
      %v573 = vld [vmem:[%s551 + $0x54] sm:$0xf]
      %v574 = vld [vmem:[%s551 + $0x58] sm:$0xf]
      %v575 = vld [vmem:[%s551 + $0x5c] sm:$0xf]
      %v576 = vld [vmem:[%s551 + $0x60] sm:$0xf]
      %v577 = vld [vmem:[%s551 + $0x64] sm:$0xf]
      %v578 = vld [vmem:[%s551 + $0x68] sm:$0xf]
      %v579 = vld [vmem:[%s551 + $0x6c] sm:$0xf]
      %v580 = vld [vmem:[%s551 + $0x70] sm:$0xf]
      %v581 = vld [vmem:[%s551 + $0x74] sm:$0xf]
      %v582 = vld [vmem:[%s551 + $0x78] sm:$0xf]
      %v583 = vld [vmem:[%s551 + $0x7c] sm:$0xf]
      %584 = vst [vmem:[#allocation1] ss:$4 sm:$0xff] %v388
      %v585 = vld.sshfl [vmem:[#allocation1] sm:$0xff pattern:$0x73625140]
      %v586 = vld.sshfl [vmem:[#allocation1 + $0x8] sm:$0xff pattern:$0x73625140]
      %v621 = vunpack.c.l.b16 %v552
      %v622 = vunpack.c.l.b16 %v553
      %v623 = vunpack.c.l.b16 %v554
      %v624 = vunpack.c.l.b16 %v555
      %v625 = vunpack.c.l.b16 %v556
      %v626 = vunpack.c.l.b16 %v557
      %v627 = vunpack.c.l.b16 %v558
      %v628 = vunpack.c.l.b16 %v559
      %v629 = vunpack.c.l.b16 %v560
      %v630 = vunpack.c.l.b16 %v561
      %v631 = vunpack.c.l.b16 %v562
      %v632 = vunpack.c.l.b16 %v563
      %v633 = vunpack.c.l.b16 %v564
      %v634 = vunpack.c.l.b16 %v565
      %v635 = vunpack.c.l.b16 %v566
      %v636 = vunpack.c.l.b16 %v567
      %v637 = vunpack.c.l.b16 %v568
      %v638 = vunpack.c.l.b16 %v569
      %v639 = vunpack.c.l.b16 %v570
      %v640 = vunpack.c.l.b16 %v571
      %v641 = vunpack.c.l.b16 %v572
      %v642 = vunpack.c.l.b16 %v573
      %v643 = vunpack.c.l.b16 %v574
      %v644 = vunpack.c.l.b16 %v575
      %v645 = vunpack.c.l.b16 %v576
      %v646 = vunpack.c.l.b16 %v577
      %v647 = vunpack.c.l.b16 %v578
      %v648 = vunpack.c.l.b16 %v579
      %v649 = vunpack.c.l.b16 %v580
      %v650 = vunpack.c.l.b16 %v581
      %v651 = vunpack.c.l.b16 %v582
      %v652 = vunpack.c.l.b16 %v583
      %v653 = vpack.c.b16 %v622, %v621
      %v654 = vpack.c.b16 %v624, %v623
      %v655 = vpack.c.b16 %v626, %v625
      %v656 = vpack.c.b16 %v628, %v627
      %v657 = vpack.c.b16 %v630, %v629
      %v658 = vpack.c.b16 %v632, %v631
      %v659 = vpack.c.b16 %v634, %v633
      %v660 = vpack.c.b16 %v636, %v635
      %v661 = vpack.c.b16 %v638, %v637
      %v662 = vpack.c.b16 %v640, %v639
      %v663 = vpack.c.b16 %v642, %v641
      %v664 = vpack.c.b16 %v644, %v643
      %v665 = vpack.c.b16 %v646, %v645
      %v666 = vpack.c.b16 %v648, %v647
      %v667 = vpack.c.b16 %v650, %v649
      %v668 = vpack.c.b16 %v652, %v651
      %685 = vmatpush.bf16.msra.mxu0 %v660
      %686 = vmatpush.bf16.msra.mxu0 %v659
      %687 = vmatpush.bf16.msra.mxu0 %v658
      %688 = vmatpush.bf16.msra.mxu0 %v657
      %689 = vmatpush.bf16.msra.mxu0 %v656
      %690 = vmatpush.bf16.msra.mxu0 %v655
      %691 = vmatpush.bf16.msra.mxu0 %v654
      %692 = vmatpush.bf16.msra.mxu0 %v653
      %693 = vmatmul.bf16.gmra.mxu0 %v585
      %v694 = vpop.f32.mrf.mxu0
      %v695 = vadd.f32 0.0, %v694
      %v696 = vpop.f32.mrf.mxu0
      %697 = vdwg.mxu0
      %698 = vmatpush.bf16.msra.mxu0 %v668
      %699 = vmatpush.bf16.msra.mxu0 %v667
      %700 = vmatpush.bf16.msra.mxu0 %v666
      %701 = vmatpush.bf16.msra.mxu0 %v665
      %702 = vmatpush.bf16.msra.mxu0 %v664
      %703 = vmatpush.bf16.msra.mxu0 %v663
      %704 = vmatpush.bf16.msra.mxu0 %v662
      %705 = vmatpush.bf16.msra.mxu0 %v661
      %706 = vmatmul.bf16.gmra.mxu0 %v586
      %v707 = vpop.f32.mrf.mxu0
      %v708 = vadd.f32 %v695, %v707
      %v709 = vpop.f32.mrf.mxu0
      %710 = vdwg.mxu0
      %s711 = scalar_lea.vmem %s2, 4
      %v712 = vld [vmem:[%s711] sm:$0xf]
      %v713 = vpack.c.bf16 %v708, %v708
      %vm714 = vcmask 31744
      %v716 = vsel %vm714, %v712, 0
      %vm718 = vcmask 1041408
      %v720 = vsel %vm718, %v713, 0
      %722 = vmatpush.bf16.msra.mxu0 0
      %723 = vmatpush.bf16.msra.mxu0 0
      %724 = vmatpush.bf16.msra.mxu0 0
      %725 = vmatpush.bf16.msra.mxu0 0
      %726 = vmatpush.bf16.msra.mxu0 0
      %727 = vmatpush.bf16.msra.mxu0 0
      %728 = vmatpush.bf16.msra.mxu0 0
      %729 = vmatpush.bf16.msra.mxu0 %v720
      %730 = vmatmul.bf16.gmra.mxu0 %v716
      %v731 = vpop.f32.mrf.mxu0
      %v732 = vadd.f32 0.0, %v731
      %v733 = vpop.f32.mrf.mxu0
      %734 = vdwg.mxu0
      %v736 = vsel %vm714, %v549, 0
      %v739 = vsel %vm718, %v550, 0
      %741 = vmatpush.bf16.msra.mxu0 0
      %742 = vmatpush.bf16.msra.mxu0 0
      %743 = vmatpush.bf16.msra.mxu0 0
      %744 = vmatpush.bf16.msra.mxu0 0
      %745 = vmatpush.bf16.msra.mxu0 0
      %746 = vmatpush.bf16.msra.mxu0 0
      %747 = vmatpush.bf16.msra.mxu0 0
      %748 = vmatpush.bf16.msra.mxu0 %v739
      %749 = vmatmul.bf16.gmra.mxu0 %v736
      %v750 = vpop.f32.mrf.mxu0
      %v751 = vadd.f32 %v732, %v750
      %v752 = vpop.f32.mrf.mxu0
      %753 = vdwg.mxu0
      %s754 = scalar_lea.vmem %s1, 256
      %v755 = vld [vmem:[%s754] sm:$0xf]
      %v756 = vld [vmem:[%s754 + $0x4] sm:$0xf]
      %v757 = vld [vmem:[%s754 + $0x8] sm:$0xf]
      %v758 = vld [vmem:[%s754 + $0xc] sm:$0xf]
      %v759 = vld [vmem:[%s754 + $0x10] sm:$0xf]
      %v760 = vld [vmem:[%s754 + $0x14] sm:$0xf]
      %v761 = vld [vmem:[%s754 + $0x18] sm:$0xf]
      %v762 = vld [vmem:[%s754 + $0x1c] sm:$0xf]
      %v763 = vld [vmem:[%s754 + $0x20] sm:$0xf]
      %v764 = vld [vmem:[%s754 + $0x24] sm:$0xf]
      %v765 = vld [vmem:[%s754 + $0x28] sm:$0xf]
      %v766 = vld [vmem:[%s754 + $0x2c] sm:$0xf]
      %v767 = vld [vmem:[%s754 + $0x30] sm:$0xf]
      %v768 = vld [vmem:[%s754 + $0x34] sm:$0xf]
      %v769 = vld [vmem:[%s754 + $0x38] sm:$0xf]
      %v770 = vld [vmem:[%s754 + $0x3c] sm:$0xf]
      %v771 = vld [vmem:[%s754 + $0x40] sm:$0xf]
      %v772 = vld [vmem:[%s754 + $0x44] sm:$0xf]
      %v773 = vld [vmem:[%s754 + $0x48] sm:$0xf]
      %v774 = vld [vmem:[%s754 + $0x4c] sm:$0xf]
      %v775 = vld [vmem:[%s754 + $0x50] sm:$0xf]
      %v776 = vld [vmem:[%s754 + $0x54] sm:$0xf]
      %v777 = vld [vmem:[%s754 + $0x58] sm:$0xf]
      %v778 = vld [vmem:[%s754 + $0x5c] sm:$0xf]
      %v779 = vld [vmem:[%s754 + $0x60] sm:$0xf]
      %v780 = vld [vmem:[%s754 + $0x64] sm:$0xf]
      %v781 = vld [vmem:[%s754 + $0x68] sm:$0xf]
      %v782 = vld [vmem:[%s754 + $0x6c] sm:$0xf]
      %v783 = vld [vmem:[%s754 + $0x70] sm:$0xf]
      %v784 = vld [vmem:[%s754 + $0x74] sm:$0xf]
      %v785 = vld [vmem:[%s754 + $0x78] sm:$0xf]
      %v786 = vld [vmem:[%s754 + $0x7c] sm:$0xf]
      %787 = vst [vmem:[#allocation1] ss:$4 sm:$0xff] %v388
      %v788 = vld.sshfl [vmem:[#allocation1] sm:$0xff pattern:$0x73625140]
      %v789 = vld.sshfl [vmem:[#allocation1 + $0x8] sm:$0xff pattern:$0x73625140]
      %v824 = vunpack.c.l.b16 %v755
      %v825 = vunpack.c.l.b16 %v756
      %v826 = vunpack.c.l.b16 %v757
      %v827 = vunpack.c.l.b16 %v758
      %v828 = vunpack.c.l.b16 %v759
      %v829 = vunpack.c.l.b16 %v760
      %v830 = vunpack.c.l.b16 %v761
      %v831 = vunpack.c.l.b16 %v762
      %v832 = vunpack.c.l.b16 %v763
      %v833 = vunpack.c.l.b16 %v764
      %v834 = vunpack.c.l.b16 %v765
      %v835 = vunpack.c.l.b16 %v766
      %v836 = vunpack.c.l.b16 %v767
      %v837 = vunpack.c.l.b16 %v768
      %v838 = vunpack.c.l.b16 %v769
      %v839 = vunpack.c.l.b16 %v770
      %v840 = vunpack.c.l.b16 %v771
      %v841 = vunpack.c.l.b16 %v772
      %v842 = vunpack.c.l.b16 %v773
      %v843 = vunpack.c.l.b16 %v774
      %v844 = vunpack.c.l.b16 %v775
      %v845 = vunpack.c.l.b16 %v776
      %v846 = vunpack.c.l.b16 %v777
      %v847 = vunpack.c.l.b16 %v778
      %v848 = vunpack.c.l.b16 %v779
      %v849 = vunpack.c.l.b16 %v780
      %v850 = vunpack.c.l.b16 %v781
      %v851 = vunpack.c.l.b16 %v782
      %v852 = vunpack.c.l.b16 %v783
      %v853 = vunpack.c.l.b16 %v784
      %v854 = vunpack.c.l.b16 %v785
      %v855 = vunpack.c.l.b16 %v786
      %v856 = vpack.c.b16 %v825, %v824
      %v857 = vpack.c.b16 %v827, %v826
      %v858 = vpack.c.b16 %v829, %v828
      %v859 = vpack.c.b16 %v831, %v830
      %v860 = vpack.c.b16 %v833, %v832
      %v861 = vpack.c.b16 %v835, %v834
      %v862 = vpack.c.b16 %v837, %v836
      %v863 = vpack.c.b16 %v839, %v838
      %v864 = vpack.c.b16 %v841, %v840
      %v865 = vpack.c.b16 %v843, %v842
      %v866 = vpack.c.b16 %v845, %v844
      %v867 = vpack.c.b16 %v847, %v846
      %v868 = vpack.c.b16 %v849, %v848
      %v869 = vpack.c.b16 %v851, %v850
      %v870 = vpack.c.b16 %v853, %v852
      %v871 = vpack.c.b16 %v855, %v854
      %888 = vmatpush.bf16.msra.mxu0 %v863
      %889 = vmatpush.bf16.msra.mxu0 %v862
      %890 = vmatpush.bf16.msra.mxu0 %v861
      %891 = vmatpush.bf16.msra.mxu0 %v860
      %892 = vmatpush.bf16.msra.mxu0 %v859
      %893 = vmatpush.bf16.msra.mxu0 %v858
      %894 = vmatpush.bf16.msra.mxu0 %v857
      %895 = vmatpush.bf16.msra.mxu0 %v856
      %896 = vmatmul.bf16.gmra.mxu0 %v788
      %v897 = vpop.f32.mrf.mxu0
      %v898 = vadd.f32 0.0, %v897
      %v899 = vpop.f32.mrf.mxu0
      %900 = vdwg.mxu0
      %901 = vmatpush.bf16.msra.mxu0 %v871
      %902 = vmatpush.bf16.msra.mxu0 %v870
      %903 = vmatpush.bf16.msra.mxu0 %v869
      %904 = vmatpush.bf16.msra.mxu0 %v868
      %905 = vmatpush.bf16.msra.mxu0 %v867
      %906 = vmatpush.bf16.msra.mxu0 %v866
      %907 = vmatpush.bf16.msra.mxu0 %v865
      %908 = vmatpush.bf16.msra.mxu0 %v864
      %909 = vmatmul.bf16.gmra.mxu0 %v789
      %v910 = vpop.f32.mrf.mxu0
      %v911 = vadd.f32 %v898, %v910
      %v912 = vpop.f32.mrf.mxu0
      %913 = vdwg.mxu0
      %s914 = scalar_lea.vmem %s2, 8
      %v915 = vld [vmem:[%s914] sm:$0xf]
      %v916 = vpack.c.bf16 %v911, %v911
      %v918 = vsel %vm714, %v915, 0
      %v921 = vsel %vm718, %v916, 0
      %923 = vmatpush.bf16.msra.mxu0 0
      %924 = vmatpush.bf16.msra.mxu0 0
      %925 = vmatpush.bf16.msra.mxu0 0
      %926 = vmatpush.bf16.msra.mxu0 0
      %927 = vmatpush.bf16.msra.mxu0 0
      %928 = vmatpush.bf16.msra.mxu0 0
      %929 = vmatpush.bf16.msra.mxu0 0
      %930 = vmatpush.bf16.msra.mxu0 %v921
      %931 = vmatmul.bf16.gmra.mxu0 %v918
      %v932 = vpop.f32.mrf.mxu0
      %v933 = vadd.f32 0.0, %v932
      %v934 = vpop.f32.mrf.mxu0
      %935 = vdwg.mxu0
      %v936 = vadd.f32 %v751, %v933
      %s937 = scalar_lea.vmem %s1, 384
      %v938 = vld [vmem:[%s937] sm:$0xf]
      %v939 = vld [vmem:[%s937 + $0x4] sm:$0xf]
      %v940 = vld [vmem:[%s937 + $0x8] sm:$0xf]
      %v941 = vld [vmem:[%s937 + $0xc] sm:$0xf]
      %v942 = vld [vmem:[%s937 + $0x10] sm:$0xf]
      %v943 = vld [vmem:[%s937 + $0x14] sm:$0xf]
      %v944 = vld [vmem:[%s937 + $0x18] sm:$0xf]
      %v945 = vld [vmem:[%s937 + $0x1c] sm:$0xf]
      %v946 = vld [vmem:[%s937 + $0x20] sm:$0xf]
      %v947 = vld [vmem:[%s937 + $0x24] sm:$0xf]
      %v948 = vld [vmem:[%s937 + $0x28] sm:$0xf]
      %v949 = vld [vmem:[%s937 + $0x2c] sm:$0xf]
      %v950 = vld [vmem:[%s937 + $0x30] sm:$0xf]
      %v951 = vld [vmem:[%s937 + $0x34] sm:$0xf]
      %v952 = vld [vmem:[%s937 + $0x38] sm:$0xf]
      %v953 = vld [vmem:[%s937 + $0x3c] sm:$0xf]
      %v954 = vld [vmem:[%s937 + $0x40] sm:$0xf]
      %v955 = vld [vmem:[%s937 + $0x44] sm:$0xf]
      %v956 = vld [vmem:[%s937 + $0x48] sm:$0xf]
      %v957 = vld [vmem:[%s937 + $0x4c] sm:$0xf]
      %v958 = vld [vmem:[%s937 + $0x50] sm:$0xf]
      %v959 = vld [vmem:[%s937 + $0x54] sm:$0xf]
      %v960 = vld [vmem:[%s937 + $0x58] sm:$0xf]
      %v961 = vld [vmem:[%s937 + $0x5c] sm:$0xf]
      %v962 = vld [vmem:[%s937 + $0x60] sm:$0xf]
      %v963 = vld [vmem:[%s937 + $0x64] sm:$0xf]
      %v964 = vld [vmem:[%s937 + $0x68] sm:$0xf]
      %v965 = vld [vmem:[%s937 + $0x6c] sm:$0xf]
      %v966 = vld [vmem:[%s937 + $0x70] sm:$0xf]
      %v967 = vld [vmem:[%s937 + $0x74] sm:$0xf]
      %v968 = vld [vmem:[%s937 + $0x78] sm:$0xf]
      %v969 = vld [vmem:[%s937 + $0x7c] sm:$0xf]
      %970 = vst [vmem:[#allocation1] ss:$4 sm:$0xff] %v388
      %v971 = vld.sshfl [vmem:[#allocation1] sm:$0xff pattern:$0x73625140]
      %v972 = vld.sshfl [vmem:[#allocation1 + $0x8] sm:$0xff pattern:$0x73625140]
      %v1007 = vunpack.c.l.b16 %v938
      %v1008 = vunpack.c.l.b16 %v939
      %v1009 = vunpack.c.l.b16 %v940
      %v1010 = vunpack.c.l.b16 %v941
      %v1011 = vunpack.c.l.b16 %v942
      %v1012 = vunpack.c.l.b16 %v943
      %v1013 = vunpack.c.l.b16 %v944
      %v1014 = vunpack.c.l.b16 %v945
      %v1015 = vunpack.c.l.b16 %v946
      %v1016 = vunpack.c.l.b16 %v947
      %v1017 = vunpack.c.l.b16 %v948
      %v1018 = vunpack.c.l.b16 %v949
      %v1019 = vunpack.c.l.b16 %v950
      %v1020 = vunpack.c.l.b16 %v951
      %v1021 = vunpack.c.l.b16 %v952
      %v1022 = vunpack.c.l.b16 %v953
      %v1023 = vunpack.c.l.b16 %v954
      %v1024 = vunpack.c.l.b16 %v955
      %v1025 = vunpack.c.l.b16 %v956
      %v1026 = vunpack.c.l.b16 %v957
      %v1027 = vunpack.c.l.b16 %v958
      %v1028 = vunpack.c.l.b16 %v959
      %v1029 = vunpack.c.l.b16 %v960
      %v1030 = vunpack.c.l.b16 %v961
      %v1031 = vunpack.c.l.b16 %v962
      %v1032 = vunpack.c.l.b16 %v963
      %v1033 = vunpack.c.l.b16 %v964
      %v1034 = vunpack.c.l.b16 %v965
      %v1035 = vunpack.c.l.b16 %v966
      %v1036 = vunpack.c.l.b16 %v967
      %v1037 = vunpack.c.l.b16 %v968
      %v1038 = vunpack.c.l.b16 %v969
      %v1039 = vpack.c.b16 %v1008, %v1007
      %v1040 = vpack.c.b16 %v1010, %v1009
      %v1041 = vpack.c.b16 %v1012, %v1011
      %v1042 = vpack.c.b16 %v1014, %v1013
      %v1043 = vpack.c.b16 %v1016, %v1015
      %v1044 = vpack.c.b16 %v1018, %v1017
      %v1045 = vpack.c.b16 %v1020, %v1019
      %v1046 = vpack.c.b16 %v1022, %v1021
      %v1047 = vpack.c.b16 %v1024, %v1023
      %v1048 = vpack.c.b16 %v1026, %v1025
      %v1049 = vpack.c.b16 %v1028, %v1027
      %v1050 = vpack.c.b16 %v1030, %v1029
      %v1051 = vpack.c.b16 %v1032, %v1031
      %v1052 = vpack.c.b16 %v1034, %v1033
      %v1053 = vpack.c.b16 %v1036, %v1035
      %v1054 = vpack.c.b16 %v1038, %v1037
      %1071 = vmatpush.bf16.msra.mxu0 %v1046
      %1072 = vmatpush.bf16.msra.mxu0 %v1045
      %1073 = vmatpush.bf16.msra.mxu0 %v1044
      %1074 = vmatpush.bf16.msra.mxu0 %v1043
      %1075 = vmatpush.bf16.msra.mxu0 %v1042
      %1076 = vmatpush.bf16.msra.mxu0 %v1041
      %1077 = vmatpush.bf16.msra.mxu0 %v1040
      %1078 = vmatpush.bf16.msra.mxu0 %v1039
      %1079 = vmatmul.bf16.gmra.mxu0 %v971
      %v1080 = vpop.f32.mrf.mxu0
      %v1081 = vadd.f32 0.0, %v1080
      %v1082 = vpop.f32.mrf.mxu0
      %1083 = vdwg.mxu0
      %1084 = vmatpush.bf16.msra.mxu0 %v1054
      %1085 = vmatpush.bf16.msra.mxu0 %v1053
      %1086 = vmatpush.bf16.msra.mxu0 %v1052
      %1087 = vmatpush.bf16.msra.mxu0 %v1051
      %1088 = vmatpush.bf16.msra.mxu0 %v1050
      %1089 = vmatpush.bf16.msra.mxu0 %v1049
      %1090 = vmatpush.bf16.msra.mxu0 %v1048
      %1091 = vmatpush.bf16.msra.mxu0 %v1047
      %1092 = vmatmul.bf16.gmra.mxu0 %v972
      %v1093 = vpop.f32.mrf.mxu0
      %v1094 = vadd.f32 %v1081, %v1093
      %v1095 = vpop.f32.mrf.mxu0
      %1096 = vdwg.mxu0
      %s1097 = scalar_lea.vmem %s2, 12
      %v1098 = vld [vmem:[%s1097] sm:$0xf]
      %v1099 = vpack.c.bf16 %v1094, %v1094
      %v1101 = vsel %vm714, %v1098, 0
      %v1104 = vsel %vm718, %v1099, 0
      %1106 = vmatpush.bf16.msra.mxu0 0
      %1107 = vmatpush.bf16.msra.mxu0 0
      %1108 = vmatpush.bf16.msra.mxu0 0
      %1109 = vmatpush.bf16.msra.mxu0 0
      %1110 = vmatpush.bf16.msra.mxu0 0
      %1111 = vmatpush.bf16.msra.mxu0 0
      %1112 = vmatpush.bf16.msra.mxu0 0
      %1113 = vmatpush.bf16.msra.mxu0 %v1104
      %1114 = vmatmul.bf16.gmra.mxu0 %v1101
      %v1115 = vpop.f32.mrf.mxu0
      %v1116 = vadd.f32 0.0, %v1115
      %v1117 = vpop.f32.mrf.mxu0
      %1118 = vdwg.mxu0
      %v1119 = vadd.f32 %v936, %v1116
      %s1120 = scalar_lea.vmem %s1, 512
      %v1121 = vld [vmem:[%s1120] sm:$0xf]
      %v1122 = vld [vmem:[%s1120 + $0x4] sm:$0xf]
      %v1123 = vld [vmem:[%s1120 + $0x8] sm:$0xf]
      %v1124 = vld [vmem:[%s1120 + $0xc] sm:$0xf]
      %v1125 = vld [vmem:[%s1120 + $0x10] sm:$0xf]
      %v1126 = vld [vmem:[%s1120 + $0x14] sm:$0xf]
      %v1127 = vld [vmem:[%s1120 + $0x18] sm:$0xf]
      %v1128 = vld [vmem:[%s1120 + $0x1c] sm:$0xf]
      %v1129 = vld [vmem:[%s1120 + $0x20] sm:$0xf]
      %v1130 = vld [vmem:[%s1120 + $0x24] sm:$0xf]
      %v1131 = vld [vmem:[%s1120 + $0x28] sm:$0xf]
      %v1132 = vld [vmem:[%s1120 + $0x2c] sm:$0xf]
      %v1133 = vld [vmem:[%s1120 + $0x30] sm:$0xf]
      %v1134 = vld [vmem:[%s1120 + $0x34] sm:$0xf]
      %v1135 = vld [vmem:[%s1120 + $0x38] sm:$0xf]
      %v1136 = vld [vmem:[%s1120 + $0x3c] sm:$0xf]
      %v1137 = vld [vmem:[%s1120 + $0x40] sm:$0xf]
      %v1138 = vld [vmem:[%s1120 + $0x44] sm:$0xf]
      %v1139 = vld [vmem:[%s1120 + $0x48] sm:$0xf]
      %v1140 = vld [vmem:[%s1120 + $0x4c] sm:$0xf]
      %v1141 = vld [vmem:[%s1120 + $0x50] sm:$0xf]
      %v1142 = vld [vmem:[%s1120 + $0x54] sm:$0xf]
      %v1143 = vld [vmem:[%s1120 + $0x58] sm:$0xf]
      %v1144 = vld [vmem:[%s1120 + $0x5c] sm:$0xf]
      %v1145 = vld [vmem:[%s1120 + $0x60] sm:$0xf]
      %v1146 = vld [vmem:[%s1120 + $0x64] sm:$0xf]
      %v1147 = vld [vmem:[%s1120 + $0x68] sm:$0xf]
      %v1148 = vld [vmem:[%s1120 + $0x6c] sm:$0xf]
      %v1149 = vld [vmem:[%s1120 + $0x70] sm:$0xf]
      %v1150 = vld [vmem:[%s1120 + $0x74] sm:$0xf]
      %v1151 = vld [vmem:[%s1120 + $0x78] sm:$0xf]
      %v1152 = vld [vmem:[%s1120 + $0x7c] sm:$0xf]
      %1153 = vst [vmem:[#allocation1] ss:$4 sm:$0xff] %v388
      %v1154 = vld.sshfl [vmem:[#allocation1] sm:$0xff pattern:$0x73625140]
      %v1155 = vld.sshfl [vmem:[#allocation1 + $0x8] sm:$0xff pattern:$0x73625140]
      %v1190 = vunpack.c.l.b16 %v1121
      %v1191 = vunpack.c.l.b16 %v1122
      %v1192 = vunpack.c.l.b16 %v1123
      %v1193 = vunpack.c.l.b16 %v1124
      %v1194 = vunpack.c.l.b16 %v1125
      %v1195 = vunpack.c.l.b16 %v1126
      %v1196 = vunpack.c.l.b16 %v1127
      %v1197 = vunpack.c.l.b16 %v1128
      %v1198 = vunpack.c.l.b16 %v1129
      %v1199 = vunpack.c.l.b16 %v1130
      %v1200 = vunpack.c.l.b16 %v1131
      %v1201 = vunpack.c.l.b16 %v1132
      %v1202 = vunpack.c.l.b16 %v1133
      %v1203 = vunpack.c.l.b16 %v1134
      %v1204 = vunpack.c.l.b16 %v1135
      %v1205 = vunpack.c.l.b16 %v1136
      %v1206 = vunpack.c.l.b16 %v1137
      %v1207 = vunpack.c.l.b16 %v1138
      %v1208 = vunpack.c.l.b16 %v1139
      %v1209 = vunpack.c.l.b16 %v1140
      %v1210 = vunpack.c.l.b16 %v1141
      %v1211 = vunpack.c.l.b16 %v1142
      %v1212 = vunpack.c.l.b16 %v1143
      %v1213 = vunpack.c.l.b16 %v1144
      %v1214 = vunpack.c.l.b16 %v1145
      %v1215 = vunpack.c.l.b16 %v1146
      %v1216 = vunpack.c.l.b16 %v1147
      %v1217 = vunpack.c.l.b16 %v1148
      %v1218 = vunpack.c.l.b16 %v1149
      %v1219 = vunpack.c.l.b16 %v1150
      %v1220 = vunpack.c.l.b16 %v1151
      %v1221 = vunpack.c.l.b16 %v1152
      %v1222 = vpack.c.b16 %v1191, %v1190
      %v1223 = vpack.c.b16 %v1193, %v1192
      %v1224 = vpack.c.b16 %v1195, %v1194
      %v1225 = vpack.c.b16 %v1197, %v1196
      %v1226 = vpack.c.b16 %v1199, %v1198
      %v1227 = vpack.c.b16 %v1201, %v1200
      %v1228 = vpack.c.b16 %v1203, %v1202
      %v1229 = vpack.c.b16 %v1205, %v1204
      %v1230 = vpack.c.b16 %v1207, %v1206
      %v1231 = vpack.c.b16 %v1209, %v1208
      %v1232 = vpack.c.b16 %v1211, %v1210
      %v1233 = vpack.c.b16 %v1213, %v1212
      %v1234 = vpack.c.b16 %v1215, %v1214
      %v1235 = vpack.c.b16 %v1217, %v1216
      %v1236 = vpack.c.b16 %v1219, %v1218
      %v1237 = vpack.c.b16 %v1221, %v1220
      %1254 = vmatpush.bf16.msra.mxu0 %v1229
      %1255 = vmatpush.bf16.msra.mxu0 %v1228
      %1256 = vmatpush.bf16.msra.mxu0 %v1227
      %1257 = vmatpush.bf16.msra.mxu0 %v1226
      %1258 = vmatpush.bf16.msra.mxu0 %v1225
      %1259 = vmatpush.bf16.msra.mxu0 %v1224
      %1260 = vmatpush.bf16.msra.mxu0 %v1223
      %1261 = vmatpush.bf16.msra.mxu0 %v1222
      %1262 = vmatmul.bf16.gmra.mxu0 %v1154
      %v1263 = vpop.f32.mrf.mxu0
      %v1264 = vadd.f32 0.0, %v1263
      %v1265 = vpop.f32.mrf.mxu0
      %1266 = vdwg.mxu0
      %1267 = vmatpush.bf16.msra.mxu0 %v1237
      %1268 = vmatpush.bf16.msra.mxu0 %v1236
      %1269 = vmatpush.bf16.msra.mxu0 %v1235
      %1270 = vmatpush.bf16.msra.mxu0 %v1234
      %1271 = vmatpush.bf16.msra.mxu0 %v1233
      %1272 = vmatpush.bf16.msra.mxu0 %v1232
      %1273 = vmatpush.bf16.msra.mxu0 %v1231
      %1274 = vmatpush.bf16.msra.mxu0 %v1230
      %1275 = vmatmul.bf16.gmra.mxu0 %v1155
      %v1276 = vpop.f32.mrf.mxu0
      %v1277 = vadd.f32 %v1264, %v1276
      %v1278 = vpop.f32.mrf.mxu0
      %1279 = vdwg.mxu0
      %s1280 = scalar_lea.vmem %s2, 16
      %v1281 = vld [vmem:[%s1280] sm:$0xf]
      %v1282 = vpack.c.bf16 %v1277, %v1277
      %v1284 = vsel %vm714, %v1281, 0
      %v1287 = vsel %vm718, %v1282, 0
      %1289 = vmatpush.bf16.msra.mxu0 0
      %1290 = vmatpush.bf16.msra.mxu0 0
      %1291 = vmatpush.bf16.msra.mxu0 0
      %1292 = vmatpush.bf16.msra.mxu0 0
      %1293 = vmatpush.bf16.msra.mxu0 0
      %1294 = vmatpush.bf16.msra.mxu0 0
      %1295 = vmatpush.bf16.msra.mxu0 0
      %1296 = vmatpush.bf16.msra.mxu0 %v1287
      %1297 = vmatmul.bf16.gmra.mxu0 %v1284
      %v1298 = vpop.f32.mrf.mxu0
      %v1299 = vadd.f32 0.0, %v1298
      %v1300 = vpop.f32.mrf.mxu0
      %1301 = vdwg.mxu0
      %v1302 = vadd.f32 %v1119, %v1299
      %s1303 = scalar_lea.vmem %s1, 640
      %v1304 = vld [vmem:[%s1303] sm:$0xf]
      %v1305 = vld [vmem:[%s1303 + $0x4] sm:$0xf]
      %v1306 = vld [vmem:[%s1303 + $0x8] sm:$0xf]
      %v1307 = vld [vmem:[%s1303 + $0xc] sm:$0xf]
      %v1308 = vld [vmem:[%s1303 + $0x10] sm:$0xf]
      %v1309 = vld [vmem:[%s1303 + $0x14] sm:$0xf]
      %v1310 = vld [vmem:[%s1303 + $0x18] sm:$0xf]
      %v1311 = vld [vmem:[%s1303 + $0x1c] sm:$0xf]
      %v1312 = vld [vmem:[%s1303 + $0x20] sm:$0xf]
      %v1313 = vld [vmem:[%s1303 + $0x24] sm:$0xf]
      %v1314 = vld [vmem:[%s1303 + $0x28] sm:$0xf]
      %v1315 = vld [vmem:[%s1303 + $0x2c] sm:$0xf]
      %v1316 = vld [vmem:[%s1303 + $0x30] sm:$0xf]
      %v1317 = vld [vmem:[%s1303 + $0x34] sm:$0xf]
      %v1318 = vld [vmem:[%s1303 + $0x38] sm:$0xf]
      %v1319 = vld [vmem:[%s1303 + $0x3c] sm:$0xf]
      %v1320 = vld [vmem:[%s1303 + $0x40] sm:$0xf]
      %v1321 = vld [vmem:[%s1303 + $0x44] sm:$0xf]
      %v1322 = vld [vmem:[%s1303 + $0x48] sm:$0xf]
      %v1323 = vld [vmem:[%s1303 + $0x4c] sm:$0xf]
      %v1324 = vld [vmem:[%s1303 + $0x50] sm:$0xf]
      %v1325 = vld [vmem:[%s1303 + $0x54] sm:$0xf]
      %v1326 = vld [vmem:[%s1303 + $0x58] sm:$0xf]
      %v1327 = vld [vmem:[%s1303 + $0x5c] sm:$0xf]
      %v1328 = vld [vmem:[%s1303 + $0x60] sm:$0xf]
      %v1329 = vld [vmem:[%s1303 + $0x64] sm:$0xf]
      %v1330 = vld [vmem:[%s1303 + $0x68] sm:$0xf]
      %v1331 = vld [vmem:[%s1303 + $0x6c] sm:$0xf]
      %v1332 = vld [vmem:[%s1303 + $0x70] sm:$0xf]
      %v1333 = vld [vmem:[%s1303 + $0x74] sm:$0xf]
      %v1334 = vld [vmem:[%s1303 + $0x78] sm:$0xf]
      %v1335 = vld [vmem:[%s1303 + $0x7c] sm:$0xf]
      %1336 = vst [vmem:[#allocation1] ss:$4 sm:$0xff] %v388
      %v1337 = vld.sshfl [vmem:[#allocation1] sm:$0xff pattern:$0x73625140]
      %v1338 = vld.sshfl [vmem:[#allocation1 + $0x8] sm:$0xff pattern:$0x73625140]
      %v1373 = vunpack.c.l.b16 %v1304
      %v1374 = vunpack.c.l.b16 %v1305
      %v1375 = vunpack.c.l.b16 %v1306
      %v1376 = vunpack.c.l.b16 %v1307
      %v1377 = vunpack.c.l.b16 %v1308
      %v1378 = vunpack.c.l.b16 %v1309
      %v1379 = vunpack.c.l.b16 %v1310
      %v1380 = vunpack.c.l.b16 %v1311
      %v1381 = vunpack.c.l.b16 %v1312
      %v1382 = vunpack.c.l.b16 %v1313
      %v1383 = vunpack.c.l.b16 %v1314
      %v1384 = vunpack.c.l.b16 %v1315
      %v1385 = vunpack.c.l.b16 %v1316
      %v1386 = vunpack.c.l.b16 %v1317
      %v1387 = vunpack.c.l.b16 %v1318
      %v1388 = vunpack.c.l.b16 %v1319
      %v1389 = vunpack.c.l.b16 %v1320
      %v1390 = vunpack.c.l.b16 %v1321
      %v1391 = vunpack.c.l.b16 %v1322
      %v1392 = vunpack.c.l.b16 %v1323
      %v1393 = vunpack.c.l.b16 %v1324
      %v1394 = vunpack.c.l.b16 %v1325
      %v1395 = vunpack.c.l.b16 %v1326
      %v1396 = vunpack.c.l.b16 %v1327
      %v1397 = vunpack.c.l.b16 %v1328
      %v1398 = vunpack.c.l.b16 %v1329
      %v1399 = vunpack.c.l.b16 %v1330
      %v1400 = vunpack.c.l.b16 %v1331
      %v1401 = vunpack.c.l.b16 %v1332
      %v1402 = vunpack.c.l.b16 %v1333
      %v1403 = vunpack.c.l.b16 %v1334
      %v1404 = vunpack.c.l.b16 %v1335
      %v1405 = vpack.c.b16 %v1374, %v1373
      %v1406 = vpack.c.b16 %v1376, %v1375
      %v1407 = vpack.c.b16 %v1378, %v1377
      %v1408 = vpack.c.b16 %v1380, %v1379
      %v1409 = vpack.c.b16 %v1382, %v1381
      %v1410 = vpack.c.b16 %v1384, %v1383
      %v1411 = vpack.c.b16 %v1386, %v1385
      %v1412 = vpack.c.b16 %v1388, %v1387
      %v1413 = vpack.c.b16 %v1390, %v1389
      %v1414 = vpack.c.b16 %v1392, %v1391
      %v1415 = vpack.c.b16 %v1394, %v1393
      %v1416 = vpack.c.b16 %v1396, %v1395
      %v1417 = vpack.c.b16 %v1398, %v1397
      %v1418 = vpack.c.b16 %v1400, %v1399
      %v1419 = vpack.c.b16 %v1402, %v1401
      %v1420 = vpack.c.b16 %v1404, %v1403
      %1437 = vmatpush.bf16.msra.mxu0 %v1412
      %1438 = vmatpush.bf16.msra.mxu0 %v1411
      %1439 = vmatpush.bf16.msra.mxu0 %v1410
      %1440 = vmatpush.bf16.msra.mxu0 %v1409
      %1441 = vmatpush.bf16.msra.mxu0 %v1408
      %1442 = vmatpush.bf16.msra.mxu0 %v1407
      %1443 = vmatpush.bf16.msra.mxu0 %v1406
      %1444 = vmatpush.bf16.msra.mxu0 %v1405
      %1445 = vmatmul.bf16.gmra.mxu0 %v1337
      %v1446 = vpop.f32.mrf.mxu0
      %v1447 = vadd.f32 0.0, %v1446
      %v1448 = vpop.f32.mrf.mxu0
      %1449 = vdwg.mxu0
      %1450 = vmatpush.bf16.msra.mxu0 %v1420
      %1451 = vmatpush.bf16.msra.mxu0 %v1419
      %1452 = vmatpush.bf16.msra.mxu0 %v1418
      %1453 = vmatpush.bf16.msra.mxu0 %v1417
      %1454 = vmatpush.bf16.msra.mxu0 %v1416
      %1455 = vmatpush.bf16.msra.mxu0 %v1415
      %1456 = vmatpush.bf16.msra.mxu0 %v1414
      %1457 = vmatpush.bf16.msra.mxu0 %v1413
      %1458 = vmatmul.bf16.gmra.mxu0 %v1338
      %v1459 = vpop.f32.mrf.mxu0
      %v1460 = vadd.f32 %v1447, %v1459
      %v1461 = vpop.f32.mrf.mxu0
      %1462 = vdwg.mxu0
      %s1463 = scalar_lea.vmem %s2, 20
      %v1464 = vld [vmem:[%s1463] sm:$0xf]
      %v1465 = vpack.c.bf16 %v1460, %v1460
      %v1467 = vsel %vm714, %v1464, 0
      %v1470 = vsel %vm718, %v1465, 0
      %1472 = vmatpush.bf16.msra.mxu0 0
      %1473 = vmatpush.bf16.msra.mxu0 0
      %1474 = vmatpush.bf16.msra.mxu0 0
      %1475 = vmatpush.bf16.msra.mxu0 0
      %1476 = vmatpush.bf16.msra.mxu0 0
      %1477 = vmatpush.bf16.msra.mxu0 0
      %1478 = vmatpush.bf16.msra.mxu0 0
      %1479 = vmatpush.bf16.msra.mxu0 %v1470
      %1480 = vmatmul.bf16.gmra.mxu0 %v1467
      %v1481 = vpop.f32.mrf.mxu0
      %v1482 = vadd.f32 0.0, %v1481
      %v1483 = vpop.f32.mrf.mxu0
      %1484 = vdwg.mxu0
      %v1485 = vadd.f32 %v1302, %v1482
      %s1486 = scalar_lea.vmem %s1, 768
      %v1487 = vld [vmem:[%s1486] sm:$0xf]
      %v1488 = vld [vmem:[%s1486 + $0x4] sm:$0xf]
      %v1489 = vld [vmem:[%s1486 + $0x8] sm:$0xf]
      %v1490 = vld [vmem:[%s1486 + $0xc] sm:$0xf]
      %v1491 = vld [vmem:[%s1486 + $0x10] sm:$0xf]
      %v1492 = vld [vmem:[%s1486 + $0x14] sm:$0xf]
      %v1493 = vld [vmem:[%s1486 + $0x18] sm:$0xf]
      %v1494 = vld [vmem:[%s1486 + $0x1c] sm:$0xf]
      %v1495 = vld [vmem:[%s1486 + $0x20] sm:$0xf]
      %v1496 = vld [vmem:[%s1486 + $0x24] sm:$0xf]
      %v1497 = vld [vmem:[%s1486 + $0x28] sm:$0xf]
      %v1498 = vld [vmem:[%s1486 + $0x2c] sm:$0xf]
      %v1499 = vld [vmem:[%s1486 + $0x30] sm:$0xf]
      %v1500 = vld [vmem:[%s1486 + $0x34] sm:$0xf]
      %v1501 = vld [vmem:[%s1486 + $0x38] sm:$0xf]
      %v1502 = vld [vmem:[%s1486 + $0x3c] sm:$0xf]
      %v1503 = vld [vmem:[%s1486 + $0x40] sm:$0xf]
      %v1504 = vld [vmem:[%s1486 + $0x44] sm:$0xf]
      %v1505 = vld [vmem:[%s1486 + $0x48] sm:$0xf]
      %v1506 = vld [vmem:[%s1486 + $0x4c] sm:$0xf]
      %v1507 = vld [vmem:[%s1486 + $0x50] sm:$0xf]
      %v1508 = vld [vmem:[%s1486 + $0x54] sm:$0xf]
      %v1509 = vld [vmem:[%s1486 + $0x58] sm:$0xf]
      %v1510 = vld [vmem:[%s1486 + $0x5c] sm:$0xf]
      %v1511 = vld [vmem:[%s1486 + $0x60] sm:$0xf]
      %v1512 = vld [vmem:[%s1486 + $0x64] sm:$0xf]
      %v1513 = vld [vmem:[%s1486 + $0x68] sm:$0xf]
      %v1514 = vld [vmem:[%s1486 + $0x6c] sm:$0xf]
      %v1515 = vld [vmem:[%s1486 + $0x70] sm:$0xf]
      %v1516 = vld [vmem:[%s1486 + $0x74] sm:$0xf]
      %v1517 = vld [vmem:[%s1486 + $0x78] sm:$0xf]
      %v1518 = vld [vmem:[%s1486 + $0x7c] sm:$0xf]
      %1519 = vst [vmem:[#allocation1] ss:$4 sm:$0xff] %v388
      %v1520 = vld.sshfl [vmem:[#allocation1] sm:$0xff pattern:$0x73625140]
      %v1521 = vld.sshfl [vmem:[#allocation1 + $0x8] sm:$0xff pattern:$0x73625140]
      %v1556 = vunpack.c.l.b16 %v1487
      %v1557 = vunpack.c.l.b16 %v1488
      %v1558 = vunpack.c.l.b16 %v1489
      %v1559 = vunpack.c.l.b16 %v1490
      %v1560 = vunpack.c.l.b16 %v1491
      %v1561 = vunpack.c.l.b16 %v1492
      %v1562 = vunpack.c.l.b16 %v1493
      %v1563 = vunpack.c.l.b16 %v1494
      %v1564 = vunpack.c.l.b16 %v1495
      %v1565 = vunpack.c.l.b16 %v1496
      %v1566 = vunpack.c.l.b16 %v1497
      %v1567 = vunpack.c.l.b16 %v1498
      %v1568 = vunpack.c.l.b16 %v1499
      %v1569 = vunpack.c.l.b16 %v1500
      %v1570 = vunpack.c.l.b16 %v1501
      %v1571 = vunpack.c.l.b16 %v1502
      %v1572 = vunpack.c.l.b16 %v1503
      %v1573 = vunpack.c.l.b16 %v1504
      %v1574 = vunpack.c.l.b16 %v1505
      %v1575 = vunpack.c.l.b16 %v1506
      %v1576 = vunpack.c.l.b16 %v1507
      %v1577 = vunpack.c.l.b16 %v1508
      %v1578 = vunpack.c.l.b16 %v1509
      %v1579 = vunpack.c.l.b16 %v1510
      %v1580 = vunpack.c.l.b16 %v1511
      %v1581 = vunpack.c.l.b16 %v1512
      %v1582 = vunpack.c.l.b16 %v1513
      %v1583 = vunpack.c.l.b16 %v1514
      %v1584 = vunpack.c.l.b16 %v1515
      %v1585 = vunpack.c.l.b16 %v1516
      %v1586 = vunpack.c.l.b16 %v1517
      %v1587 = vunpack.c.l.b16 %v1518
      %v1588 = vpack.c.b16 %v1557, %v1556
      %v1589 = vpack.c.b16 %v1559, %v1558
      %v1590 = vpack.c.b16 %v1561, %v1560
      %v1591 = vpack.c.b16 %v1563, %v1562
      %v1592 = vpack.c.b16 %v1565, %v1564
      %v1593 = vpack.c.b16 %v1567, %v1566
      %v1594 = vpack.c.b16 %v1569, %v1568
      %v1595 = vpack.c.b16 %v1571, %v1570
      %v1596 = vpack.c.b16 %v1573, %v1572
      %v1597 = vpack.c.b16 %v1575, %v1574
      %v1598 = vpack.c.b16 %v1577, %v1576
      %v1599 = vpack.c.b16 %v1579, %v1578
      %v1600 = vpack.c.b16 %v1581, %v1580
      %v1601 = vpack.c.b16 %v1583, %v1582
      %v1602 = vpack.c.b16 %v1585, %v1584
      %v1603 = vpack.c.b16 %v1587, %v1586
      %1620 = vmatpush.bf16.msra.mxu0 %v1595
      %1621 = vmatpush.bf16.msra.mxu0 %v1594
      %1622 = vmatpush.bf16.msra.mxu0 %v1593
      %1623 = vmatpush.bf16.msra.mxu0 %v1592
      %1624 = vmatpush.bf16.msra.mxu0 %v1591
      %1625 = vmatpush.bf16.msra.mxu0 %v1590
      %1626 = vmatpush.bf16.msra.mxu0 %v1589
      %1627 = vmatpush.bf16.msra.mxu0 %v1588
      %1628 = vmatmul.bf16.gmra.mxu0 %v1520
      %v1629 = vpop.f32.mrf.mxu0
      %v1630 = vadd.f32 0.0, %v1629
      %v1631 = vpop.f32.mrf.mxu0
      %1632 = vdwg.mxu0
      %1633 = vmatpush.bf16.msra.mxu0 %v1603
      %1634 = vmatpush.bf16.msra.mxu0 %v1602
      %1635 = vmatpush.bf16.msra.mxu0 %v1601
      %1636 = vmatpush.bf16.msra.mxu0 %v1600
      %1637 = vmatpush.bf16.msra.mxu0 %v1599
      %1638 = vmatpush.bf16.msra.mxu0 %v1598
      %1639 = vmatpush.bf16.msra.mxu0 %v1597
      %1640 = vmatpush.bf16.msra.mxu0 %v1596
      %1641 = vmatmul.bf16.gmra.mxu0 %v1521
      %v1642 = vpop.f32.mrf.mxu0
      %v1643 = vadd.f32 %v1630, %v1642
      %v1644 = vpop.f32.mrf.mxu0
      %1645 = vdwg.mxu0
      %s1646 = scalar_lea.vmem %s2, 24
      %v1647 = vld [vmem:[%s1646] sm:$0xf]
      %v1648 = vpack.c.bf16 %v1643, %v1643
      %v1650 = vsel %vm714, %v1647, 0
      %v1653 = vsel %vm718, %v1648, 0
      %1655 = vmatpush.bf16.msra.mxu0 0
      %1656 = vmatpush.bf16.msra.mxu0 0
      %1657 = vmatpush.bf16.msra.mxu0 0
      %1658 = vmatpush.bf16.msra.mxu0 0
      %1659 = vmatpush.bf16.msra.mxu0 0
      %1660 = vmatpush.bf16.msra.mxu0 0
      %1661 = vmatpush.bf16.msra.mxu0 0
      %1662 = vmatpush.bf16.msra.mxu0 %v1653
      %1663 = vmatmul.bf16.gmra.mxu0 %v1650
      %v1664 = vpop.f32.mrf.mxu0
      %v1665 = vadd.f32 0.0, %v1664
      %v1666 = vpop.f32.mrf.mxu0
      %1667 = vdwg.mxu0
      %v1668 = vadd.f32 %v1485, %v1665
      %s1669 = scalar_lea.vmem %s1, 896
      %v1670 = vld [vmem:[%s1669] sm:$0xf]
      %v1671 = vld [vmem:[%s1669 + $0x4] sm:$0xf]
      %v1672 = vld [vmem:[%s1669 + $0x8] sm:$0xf]
      %v1673 = vld [vmem:[%s1669 + $0xc] sm:$0xf]
      %v1674 = vld [vmem:[%s1669 + $0x10] sm:$0xf]
      %v1675 = vld [vmem:[%s1669 + $0x14] sm:$0xf]
      %v1676 = vld [vmem:[%s1669 + $0x18] sm:$0xf]
      %v1677 = vld [vmem:[%s1669 + $0x1c] sm:$0xf]
      %v1678 = vld [vmem:[%s1669 + $0x20] sm:$0xf]
      %v1679 = vld [vmem:[%s1669 + $0x24] sm:$0xf]
      %v1680 = vld [vmem:[%s1669 + $0x28] sm:$0xf]
      %v1681 = vld [vmem:[%s1669 + $0x2c] sm:$0xf]
      %v1682 = vld [vmem:[%s1669 + $0x30] sm:$0xf]
      %v1683 = vld [vmem:[%s1669 + $0x34] sm:$0xf]
      %v1684 = vld [vmem:[%s1669 + $0x38] sm:$0xf]
      %v1685 = vld [vmem:[%s1669 + $0x3c] sm:$0xf]
      %v1686 = vld [vmem:[%s1669 + $0x40] sm:$0xf]
      %v1687 = vld [vmem:[%s1669 + $0x44] sm:$0xf]
      %v1688 = vld [vmem:[%s1669 + $0x48] sm:$0xf]
      %v1689 = vld [vmem:[%s1669 + $0x4c] sm:$0xf]
      %v1690 = vld [vmem:[%s1669 + $0x50] sm:$0xf]
      %v1691 = vld [vmem:[%s1669 + $0x54] sm:$0xf]
      %v1692 = vld [vmem:[%s1669 + $0x58] sm:$0xf]
      %v1693 = vld [vmem:[%s1669 + $0x5c] sm:$0xf]
      %v1694 = vld [vmem:[%s1669 + $0x60] sm:$0xf]
      %v1695 = vld [vmem:[%s1669 + $0x64] sm:$0xf]
      %v1696 = vld [vmem:[%s1669 + $0x68] sm:$0xf]
      %v1697 = vld [vmem:[%s1669 + $0x6c] sm:$0xf]
      %v1698 = vld [vmem:[%s1669 + $0x70] sm:$0xf]
      %v1699 = vld [vmem:[%s1669 + $0x74] sm:$0xf]
      %v1700 = vld [vmem:[%s1669 + $0x78] sm:$0xf]
      %v1701 = vld [vmem:[%s1669 + $0x7c] sm:$0xf]
      %1702 = vst [vmem:[#allocation1] ss:$4 sm:$0xff] %v388
      %v1703 = vld.sshfl [vmem:[#allocation1] sm:$0xff pattern:$0x73625140]
      %v1704 = vld.sshfl [vmem:[#allocation1 + $0x8] sm:$0xff pattern:$0x73625140]
      %v1739 = vunpack.c.l.b16 %v1670
      %v1740 = vunpack.c.l.b16 %v1671
      %v1741 = vunpack.c.l.b16 %v1672
      %v1742 = vunpack.c.l.b16 %v1673
      %v1743 = vunpack.c.l.b16 %v1674
      %v1744 = vunpack.c.l.b16 %v1675
      %v1745 = vunpack.c.l.b16 %v1676
      %v1746 = vunpack.c.l.b16 %v1677
      %v1747 = vunpack.c.l.b16 %v1678
      %v1748 = vunpack.c.l.b16 %v1679
      %v1749 = vunpack.c.l.b16 %v1680
      %v1750 = vunpack.c.l.b16 %v1681
      %v1751 = vunpack.c.l.b16 %v1682
      %v1752 = vunpack.c.l.b16 %v1683
      %v1753 = vunpack.c.l.b16 %v1684
      %v1754 = vunpack.c.l.b16 %v1685
      %v1755 = vunpack.c.l.b16 %v1686
      %v1756 = vunpack.c.l.b16 %v1687
      %v1757 = vunpack.c.l.b16 %v1688
      %v1758 = vunpack.c.l.b16 %v1689
      %v1759 = vunpack.c.l.b16 %v1690
      %v1760 = vunpack.c.l.b16 %v1691
      %v1761 = vunpack.c.l.b16 %v1692
      %v1762 = vunpack.c.l.b16 %v1693
      %v1763 = vunpack.c.l.b16 %v1694
      %v1764 = vunpack.c.l.b16 %v1695
      %v1765 = vunpack.c.l.b16 %v1696
      %v1766 = vunpack.c.l.b16 %v1697
      %v1767 = vunpack.c.l.b16 %v1698
      %v1768 = vunpack.c.l.b16 %v1699
      %v1769 = vunpack.c.l.b16 %v1700
      %v1770 = vunpack.c.l.b16 %v1701
      %v1771 = vpack.c.b16 %v1740, %v1739
      %v1772 = vpack.c.b16 %v1742, %v1741
      %v1773 = vpack.c.b16 %v1744, %v1743
      %v1774 = vpack.c.b16 %v1746, %v1745
      %v1775 = vpack.c.b16 %v1748, %v1747
      %v1776 = vpack.c.b16 %v1750, %v1749
      %v1777 = vpack.c.b16 %v1752, %v1751
      %v1778 = vpack.c.b16 %v1754, %v1753
      %v1779 = vpack.c.b16 %v1756, %v1755
      %v1780 = vpack.c.b16 %v1758, %v1757
      %v1781 = vpack.c.b16 %v1760, %v1759
      %v1782 = vpack.c.b16 %v1762, %v1761
      %v1783 = vpack.c.b16 %v1764, %v1763
      %v1784 = vpack.c.b16 %v1766, %v1765
      %v1785 = vpack.c.b16 %v1768, %v1767
      %v1786 = vpack.c.b16 %v1770, %v1769
      %1803 = vmatpush.bf16.msra.mxu0 %v1778
      %1804 = vmatpush.bf16.msra.mxu0 %v1777
      %1805 = vmatpush.bf16.msra.mxu0 %v1776
      %1806 = vmatpush.bf16.msra.mxu0 %v1775
      %1807 = vmatpush.bf16.msra.mxu0 %v1774
      %1808 = vmatpush.bf16.msra.mxu0 %v1773
      %1809 = vmatpush.bf16.msra.mxu0 %v1772
      %1810 = vmatpush.bf16.msra.mxu0 %v1771
      %1811 = vmatmul.bf16.gmra.mxu0 %v1703
      %v1812 = vpop.f32.mrf.mxu0
      %v1813 = vadd.f32 0.0, %v1812
      %v1814 = vpop.f32.mrf.mxu0
      %1815 = vdwg.mxu0
      %1816 = vmatpush.bf16.msra.mxu0 %v1786
      %1817 = vmatpush.bf16.msra.mxu0 %v1785
      %1818 = vmatpush.bf16.msra.mxu0 %v1784
      %1819 = vmatpush.bf16.msra.mxu0 %v1783
      %1820 = vmatpush.bf16.msra.mxu0 %v1782
      %1821 = vmatpush.bf16.msra.mxu0 %v1781
      %1822 = vmatpush.bf16.msra.mxu0 %v1780
      %1823 = vmatpush.bf16.msra.mxu0 %v1779
      %1824 = vmatmul.bf16.gmra.mxu0 %v1704
      %v1825 = vpop.f32.mrf.mxu0
      %v1826 = vadd.f32 %v1813, %v1825
      %v1827 = vpop.f32.mrf.mxu0
      %1828 = vdwg.mxu0
      %s1829 = scalar_lea.vmem %s2, 28
      %v1830 = vld [vmem:[%s1829] sm:$0xf]
      %v1831 = vpack.c.bf16 %v1826, %v1826
      %v1833 = vsel %vm714, %v1830, 0
      %v1836 = vsel %vm718, %v1831, 0
      %1838 = vmatpush.bf16.msra.mxu0 0
      %1839 = vmatpush.bf16.msra.mxu0 0
      %1840 = vmatpush.bf16.msra.mxu0 0
      %1841 = vmatpush.bf16.msra.mxu0 0
      %1842 = vmatpush.bf16.msra.mxu0 0
      %1843 = vmatpush.bf16.msra.mxu0 0
      %1844 = vmatpush.bf16.msra.mxu0 0
      %1845 = vmatpush.bf16.msra.mxu0 %v1836
      %1846 = vmatmul.bf16.gmra.mxu0 %v1833
      %v1847 = vpop.f32.mrf.mxu0
      %v1848 = vadd.f32 0.0, %v1847
      %v1849 = vpop.f32.mrf.mxu0
      %1850 = vdwg.mxu0
      %v1851 = vadd.f32 %v1668, %v1848
      %s1852 = scalar_lea.vmem %s1, 1024
      %v1853 = vld [vmem:[%s1852] sm:$0xf]
      %v1854 = vld [vmem:[%s1852 + $0x4] sm:$0xf]
      %v1855 = vld [vmem:[%s1852 + $0x8] sm:$0xf]
      %v1856 = vld [vmem:[%s1852 + $0xc] sm:$0xf]
      %v1857 = vld [vmem:[%s1852 + $0x10] sm:$0xf]
      %v1858 = vld [vmem:[%s1852 + $0x14] sm:$0xf]
      %v1859 = vld [vmem:[%s1852 + $0x18] sm:$0xf]
      %v1860 = vld [vmem:[%s1852 + $0x1c] sm:$0xf]
      %v1861 = vld [vmem:[%s1852 + $0x20] sm:$0xf]
      %v1862 = vld [vmem:[%s1852 + $0x24] sm:$0xf]
      %v1863 = vld [vmem:[%s1852 + $0x28] sm:$0xf]
      %v1864 = vld [vmem:[%s1852 + $0x2c] sm:$0xf]
      %v1865 = vld [vmem:[%s1852 + $0x30] sm:$0xf]
      %v1866 = vld [vmem:[%s1852 + $0x34] sm:$0xf]
      %v1867 = vld [vmem:[%s1852 + $0x38] sm:$0xf]
      %v1868 = vld [vmem:[%s1852 + $0x3c] sm:$0xf]
      %v1869 = vld [vmem:[%s1852 + $0x40] sm:$0xf]
      %v1870 = vld [vmem:[%s1852 + $0x44] sm:$0xf]
      %v1871 = vld [vmem:[%s1852 + $0x48] sm:$0xf]
      %v1872 = vld [vmem:[%s1852 + $0x4c] sm:$0xf]
      %v1873 = vld [vmem:[%s1852 + $0x50] sm:$0xf]
      %v1874 = vld [vmem:[%s1852 + $0x54] sm:$0xf]
      %v1875 = vld [vmem:[%s1852 + $0x58] sm:$0xf]
      %v1876 = vld [vmem:[%s1852 + $0x5c] sm:$0xf]
      %v1877 = vld [vmem:[%s1852 + $0x60] sm:$0xf]
      %v1878 = vld [vmem:[%s1852 + $0x64] sm:$0xf]
      %v1879 = vld [vmem:[%s1852 + $0x68] sm:$0xf]
      %v1880 = vld [vmem:[%s1852 + $0x6c] sm:$0xf]
      %v1881 = vld [vmem:[%s1852 + $0x70] sm:$0xf]
      %v1882 = vld [vmem:[%s1852 + $0x74] sm:$0xf]
      %v1883 = vld [vmem:[%s1852 + $0x78] sm:$0xf]
      %v1884 = vld [vmem:[%s1852 + $0x7c] sm:$0xf]
      %1885 = vst [vmem:[#allocation1] ss:$4 sm:$0xff] %v388
      %v1886 = vld.sshfl [vmem:[#allocation1] sm:$0xff pattern:$0x73625140]
      %v1887 = vld.sshfl [vmem:[#allocation1 + $0x8] sm:$0xff pattern:$0x73625140]
      %v1922 = vunpack.c.l.b16 %v1853
      %v1923 = vunpack.c.l.b16 %v1854
      %v1924 = vunpack.c.l.b16 %v1855
      %v1925 = vunpack.c.l.b16 %v1856
      %v1926 = vunpack.c.l.b16 %v1857
      %v1927 = vunpack.c.l.b16 %v1858
      %v1928 = vunpack.c.l.b16 %v1859
      %v1929 = vunpack.c.l.b16 %v1860
      %v1930 = vunpack.c.l.b16 %v1861
      %v1931 = vunpack.c.l.b16 %v1862
      %v1932 = vunpack.c.l.b16 %v1863
      %v1933 = vunpack.c.l.b16 %v1864
      %v1934 = vunpack.c.l.b16 %v1865
      %v1935 = vunpack.c.l.b16 %v1866
      %v1936 = vunpack.c.l.b16 %v1867
      %v1937 = vunpack.c.l.b16 %v1868
      %v1938 = vunpack.c.l.b16 %v1869
      %v1939 = vunpack.c.l.b16 %v1870
      %v1940 = vunpack.c.l.b16 %v1871
      %v1941 = vunpack.c.l.b16 %v1872
      %v1942 = vunpack.c.l.b16 %v1873
      %v1943 = vunpack.c.l.b16 %v1874
      %v1944 = vunpack.c.l.b16 %v1875
      %v1945 = vunpack.c.l.b16 %v1876
      %v1946 = vunpack.c.l.b16 %v1877
      %v1947 = vunpack.c.l.b16 %v1878
      %v1948 = vunpack.c.l.b16 %v1879
      %v1949 = vunpack.c.l.b16 %v1880
      %v1950 = vunpack.c.l.b16 %v1881
      %v1951 = vunpack.c.l.b16 %v1882
      %v1952 = vunpack.c.l.b16 %v1883
      %v1953 = vunpack.c.l.b16 %v1884
      %v1954 = vpack.c.b16 %v1923, %v1922
      %v1955 = vpack.c.b16 %v1925, %v1924
      %v1956 = vpack.c.b16 %v1927, %v1926
      %v1957 = vpack.c.b16 %v1929, %v1928
      %v1958 = vpack.c.b16 %v1931, %v1930
      %v1959 = vpack.c.b16 %v1933, %v1932
      %v1960 = vpack.c.b16 %v1935, %v1934
      %v1961 = vpack.c.b16 %v1937, %v1936
      %v1962 = vpack.c.b16 %v1939, %v1938
      %v1963 = vpack.c.b16 %v1941, %v1940
      %v1964 = vpack.c.b16 %v1943, %v1942
      %v1965 = vpack.c.b16 %v1945, %v1944
      %v1966 = vpack.c.b16 %v1947, %v1946
      %v1967 = vpack.c.b16 %v1949, %v1948
      %v1968 = vpack.c.b16 %v1951, %v1950
      %v1969 = vpack.c.b16 %v1953, %v1952
      %1986 = vmatpush.bf16.msra.mxu0 %v1961
      %1987 = vmatpush.bf16.msra.mxu0 %v1960
      %1988 = vmatpush.bf16.msra.mxu0 %v1959
      %1989 = vmatpush.bf16.msra.mxu0 %v1958
      %1990 = vmatpush.bf16.msra.mxu0 %v1957
      %1991 = vmatpush.bf16.msra.mxu0 %v1956
      %1992 = vmatpush.bf16.msra.mxu0 %v1955
      %1993 = vmatpush.bf16.msra.mxu0 %v1954
      %1994 = vmatmul.bf16.gmra.mxu0 %v1886
      %v1995 = vpop.f32.mrf.mxu0
      %v1996 = vadd.f32 0.0, %v1995
      %v1997 = vpop.f32.mrf.mxu0
      %1998 = vdwg.mxu0
      %1999 = vmatpush.bf16.msra.mxu0 %v1969
      %2000 = vmatpush.bf16.msra.mxu0 %v1968
      %2001 = vmatpush.bf16.msra.mxu0 %v1967
      %2002 = vmatpush.bf16.msra.mxu0 %v1966
      %2003 = vmatpush.bf16.msra.mxu0 %v1965
      %2004 = vmatpush.bf16.msra.mxu0 %v1964
      %2005 = vmatpush.bf16.msra.mxu0 %v1963
      %2006 = vmatpush.bf16.msra.mxu0 %v1962
      %2007 = vmatmul.bf16.gmra.mxu0 %v1887
      %v2008 = vpop.f32.mrf.mxu0
      %v2009 = vadd.f32 %v1996, %v2008
      %v2010 = vpop.f32.mrf.mxu0
      %2011 = vdwg.mxu0
      %s2012 = scalar_lea.vmem %s2, 32
      %v2013 = vld [vmem:[%s2012] sm:$0xf]
      %v2014 = vpack.c.bf16 %v2009, %v2009
      %v2016 = vsel %vm714, %v2013, 0
      %v2019 = vsel %vm718, %v2014, 0
      %2021 = vmatpush.bf16.msra.mxu0 0
      %2022 = vmatpush.bf16.msra.mxu0 0
      %2023 = vmatpush.bf16.msra.mxu0 0
      %2024 = vmatpush.bf16.msra.mxu0 0
      %2025 = vmatpush.bf16.msra.mxu0 0
      %2026 = vmatpush.bf16.msra.mxu0 0
      %2027 = vmatpush.bf16.msra.mxu0 0
      %2028 = vmatpush.bf16.msra.mxu0 %v2019
      %2029 = vmatmul.bf16.gmra.mxu0 %v2016
      %v2030 = vpop.f32.mrf.mxu0
      %v2031 = vadd.f32 0.0, %v2030
      %v2032 = vpop.f32.mrf.mxu0
      %2033 = vdwg.mxu0
      %v2034 = vadd.f32 %v1851, %v2031
      %v2035 = vld [vmem:[%s3] sm:$0xff]
      %2037 = vset.pattern.permute.xlu0 0
      %2038 = vperm.xlu0 %2037, %v2035
      %v2039 = vpop.permute.xlu0 %2038
      %v2041 = vadd.f32 %v2034, %v2039
      %v2042 = vmax.f32 %v2041, 0.0
      %v2043 = vpack.c.bf16 %v2042, %v2042
      %v2044 = vld [vmem:[%s4] sm:$0xf]
      %v2045 = vld [vmem:[%s4 + $0x4] sm:$0xf]
      %v2046 = vld [vmem:[%s4 + $0x8] sm:$0xf]
      %v2047 = vld [vmem:[%s4 + $0xc] sm:$0xf]
      %v2048 = vld [vmem:[%s4 + $0x10] sm:$0xf]
      %v2049 = vld [vmem:[%s4 + $0x14] sm:$0xf]
      %v2050 = vld [vmem:[%s4 + $0x18] sm:$0xf]
      %v2051 = vld [vmem:[%s4 + $0x1c] sm:$0xf]
      %v2060 = vunpack.c.l.b16 %v2044
      %v2061 = vunpack.c.l.b16 %v2045
      %v2062 = vunpack.c.l.b16 %v2046
      %v2063 = vunpack.c.l.b16 %v2047
      %v2064 = vunpack.c.l.b16 %v2048
      %v2065 = vunpack.c.l.b16 %v2049
      %v2066 = vunpack.c.l.b16 %v2050
      %v2067 = vunpack.c.l.b16 %v2051
      %v2068 = vpack.c.b16 %v2061, %v2060
      %v2069 = vpack.c.b16 %v2063, %v2062
      %v2070 = vpack.c.b16 %v2065, %v2064
      %v2071 = vpack.c.b16 %v2067, %v2066
      %vm2076 = vcmask 523264
      %v2078 = vsel %vm2076, %v2043, 0
      %2080 = vmatpush.bf16.msra.mxu0 0
      %2081 = vmatpush.bf16.msra.mxu0 0
      %2082 = vmatpush.bf16.msra.mxu0 0
      %2083 = vmatpush.bf16.msra.mxu0 0
      %2084 = vmatpush.bf16.msra.mxu0 %v2071
      %2085 = vmatpush.bf16.msra.mxu0 %v2070
      %2086 = vmatpush.bf16.msra.mxu0 %v2069
      %2087 = vmatpush.bf16.msra.mxu0 %v2068
      %2088 = vmatmul.bf16.gmra.mxu0 %v2078
      %v2089 = vpop.f32.mrf.mxu0
      %v2090 = vadd.f32 0.0, %v2089
      %v2091 = vpop.f32.mrf.mxu0
      %2092 = vdwg.mxu0
      %v2093 = vld [vmem:[%s5] sm:$0xf]
      %v2094 = vld [vmem:[%s5 + $0x4] sm:$0xf]
      %v2095 = vpack.c.bf16 %v2090, %v2090
      %s2096 = scalar_lea.vmem %s4, 32
      %v2097 = vld [vmem:[%s2096] sm:$0xf]
      %v2098 = vld [vmem:[%s2096 + $0x4] sm:$0xf]
      %v2099 = vld [vmem:[%s2096 + $0x8] sm:$0xf]
      %v2100 = vld [vmem:[%s2096 + $0xc] sm:$0xf]
      %v2101 = vld [vmem:[%s2096 + $0x10] sm:$0xf]
      %v2102 = vld [vmem:[%s2096 + $0x14] sm:$0xf]
      %v2103 = vld [vmem:[%s2096 + $0x18] sm:$0xf]
      %v2104 = vld [vmem:[%s2096 + $0x1c] sm:$0xf]
      %v2113 = vunpack.c.l.b16 %v2097
      %v2114 = vunpack.c.l.b16 %v2098
      %v2115 = vunpack.c.l.b16 %v2099
      %v2116 = vunpack.c.l.b16 %v2100
      %v2117 = vunpack.c.l.b16 %v2101
      %v2118 = vunpack.c.l.b16 %v2102
      %v2119 = vunpack.c.l.b16 %v2103
      %v2120 = vunpack.c.l.b16 %v2104
      %v2121 = vpack.c.b16 %v2114, %v2113
      %v2122 = vpack.c.b16 %v2116, %v2115
      %v2123 = vpack.c.b16 %v2118, %v2117
      %v2124 = vpack.c.b16 %v2120, %v2119
      %2129 = vmatpush.bf16.msra.mxu0 0
      %2130 = vmatpush.bf16.msra.mxu0 0
      %2131 = vmatpush.bf16.msra.mxu0 0
      %2132 = vmatpush.bf16.msra.mxu0 0
      %2133 = vmatpush.bf16.msra.mxu0 %v2124
      %2134 = vmatpush.bf16.msra.mxu0 %v2123
      %2135 = vmatpush.bf16.msra.mxu0 %v2122
      %2136 = vmatpush.bf16.msra.mxu0 %v2121
      %2137 = vmatmul.bf16.gmra.mxu0 %v2078
      %v2138 = vpop.f32.mrf.mxu0
      %v2139 = vadd.f32 0.0, %v2138
      %v2140 = vpop.f32.mrf.mxu0
      %2141 = vdwg.mxu0
      %s2142 = scalar_lea.vmem %s5, 8
      %v2143 = vld [vmem:[%s2142] sm:$0xf]
      %v2144 = vld [vmem:[%s2142 + $0x4] sm:$0xf]
      %v2145 = vpack.c.bf16 %v2139, %v2139
      %v2148 = vunpack.c.l.b16 %v2143
      %v2149 = vunpack.c.l.b16 %v2144
      %v2150 = vpack.c.b16 %v2149, %v2148
      %vm2151 = vcmask 64512
      %v2153 = vsel %vm2151, %v2150, 0
      %vm2155 = vcmask 1043456
      %v2157 = vsel %vm2155, %v2145, 0
      %2159 = vmatpush.bf16.msra.mxu0 0
      %2160 = vmatpush.bf16.msra.mxu0 0
      %2161 = vmatpush.bf16.msra.mxu0 0
      %2162 = vmatpush.bf16.msra.mxu0 0
      %2163 = vmatpush.bf16.msra.mxu0 0
      %2164 = vmatpush.bf16.msra.mxu0 0
      %2165 = vmatpush.bf16.msra.mxu0 0
      %2166 = vmatpush.bf16.msra.mxu0 %v2157
      %2167 = vmatmul.bf16.gmra.mxu0 %v2153
      %v2168 = vpop.f32.mrf.mxu0
      %v2169 = vadd.f32 0.0, %v2168
      %v2170 = vpop.f32.mrf.mxu0
      %v2171 = vadd.f32 0.0, %v2170
      %2172 = vdwg.mxu0
      %v2175 = vunpack.c.l.b16 %v2093
      %v2176 = vunpack.c.l.b16 %v2094
      %v2177 = vpack.c.b16 %v2176, %v2175
      %v2179 = vsel %vm2151, %v2177, 0
      %v2182 = vsel %vm2155, %v2095, 0
      %2184 = vmatpush.bf16.msra.mxu0 0
      %2185 = vmatpush.bf16.msra.mxu0 0
      %2186 = vmatpush.bf16.msra.mxu0 0
      %2187 = vmatpush.bf16.msra.mxu0 0
      %2188 = vmatpush.bf16.msra.mxu0 0
      %2189 = vmatpush.bf16.msra.mxu0 0
      %2190 = vmatpush.bf16.msra.mxu0 0
      %2191 = vmatpush.bf16.msra.mxu0 %v2182
      %2192 = vmatmul.bf16.gmra.mxu0 %v2179
      %v2193 = vpop.f32.mrf.mxu0
      %v2194 = vadd.f32 %v2169, %v2193
      %v2195 = vpop.f32.mrf.mxu0
      %v2196 = vadd.f32 %v2171, %v2195
      %2197 = vdwg.mxu0
      %s2198 = scalar_lea.vmem %s4, 64
      %v2199 = vld [vmem:[%s2198] sm:$0xf]
      %v2200 = vld [vmem:[%s2198 + $0x4] sm:$0xf]
      %v2201 = vld [vmem:[%s2198 + $0x8] sm:$0xf]
      %v2202 = vld [vmem:[%s2198 + $0xc] sm:$0xf]
      %v2203 = vld [vmem:[%s2198 + $0x10] sm:$0xf]
      %v2204 = vld [vmem:[%s2198 + $0x14] sm:$0xf]
      %v2205 = vld [vmem:[%s2198 + $0x18] sm:$0xf]
      %v2206 = vld [vmem:[%s2198 + $0x1c] sm:$0xf]
      %v2215 = vunpack.c.l.b16 %v2199
      %v2216 = vunpack.c.l.b16 %v2200
      %v2217 = vunpack.c.l.b16 %v2201
      %v2218 = vunpack.c.l.b16 %v2202
      %v2219 = vunpack.c.l.b16 %v2203
      %v2220 = vunpack.c.l.b16 %v2204
      %v2221 = vunpack.c.l.b16 %v2205
      %v2222 = vunpack.c.l.b16 %v2206
      %v2223 = vpack.c.b16 %v2216, %v2215
      %v2224 = vpack.c.b16 %v2218, %v2217
      %v2225 = vpack.c.b16 %v2220, %v2219
      %v2226 = vpack.c.b16 %v2222, %v2221
      %2231 = vmatpush.bf16.msra.mxu0 0
      %2232 = vmatpush.bf16.msra.mxu0 0
      %2233 = vmatpush.bf16.msra.mxu0 0
      %2234 = vmatpush.bf16.msra.mxu0 0
      %2235 = vmatpush.bf16.msra.mxu0 %v2226
      %2236 = vmatpush.bf16.msra.mxu0 %v2225
      %2237 = vmatpush.bf16.msra.mxu0 %v2224
      %2238 = vmatpush.bf16.msra.mxu0 %v2223
      %2239 = vmatmul.bf16.gmra.mxu0 %v2078
      %v2240 = vpop.f32.mrf.mxu0
      %v2241 = vadd.f32 0.0, %v2240
      %v2242 = vpop.f32.mrf.mxu0
      %2243 = vdwg.mxu0
      %s2244 = scalar_lea.vmem %s5, 16
      %v2245 = vld [vmem:[%s2244] sm:$0xf]
      %v2246 = vld [vmem:[%s2244 + $0x4] sm:$0xf]
      %v2247 = vpack.c.bf16 %v2241, %v2241
      %v2250 = vunpack.c.l.b16 %v2245
      %v2251 = vunpack.c.l.b16 %v2246
      %v2252 = vpack.c.b16 %v2251, %v2250
      %v2254 = vsel %vm2151, %v2252, 0
      %v2257 = vsel %vm2155, %v2247, 0
      %2259 = vmatpush.bf16.msra.mxu0 0
      %2260 = vmatpush.bf16.msra.mxu0 0
      %2261 = vmatpush.bf16.msra.mxu0 0
      %2262 = vmatpush.bf16.msra.mxu0 0
      %2263 = vmatpush.bf16.msra.mxu0 0
      %2264 = vmatpush.bf16.msra.mxu0 0
      %2265 = vmatpush.bf16.msra.mxu0 0
      %2266 = vmatpush.bf16.msra.mxu0 %v2257
      %2267 = vmatmul.bf16.gmra.mxu0 %v2254
      %v2268 = vpop.f32.mrf.mxu0
      %v2269 = vadd.f32 0.0, %v2268
      %v2270 = vpop.f32.mrf.mxu0
      %v2271 = vadd.f32 0.0, %v2270
      %2272 = vdwg.mxu0
      %v2273 = vadd.f32 %v2194, %v2269
      %v2274 = vadd.f32 %v2196, %v2271
      %s2275 = scalar_lea.vmem %s4, 96
      %v2276 = vld [vmem:[%s2275] sm:$0xf]
      %v2277 = vld [vmem:[%s2275 + $0x4] sm:$0xf]
      %v2278 = vld [vmem:[%s2275 + $0x8] sm:$0xf]
      %v2279 = vld [vmem:[%s2275 + $0xc] sm:$0xf]
      %v2280 = vld [vmem:[%s2275 + $0x10] sm:$0xf]
      %v2281 = vld [vmem:[%s2275 + $0x14] sm:$0xf]
      %v2282 = vld [vmem:[%s2275 + $0x18] sm:$0xf]
      %v2283 = vld [vmem:[%s2275 + $0x1c] sm:$0xf]
      %v2292 = vunpack.c.l.b16 %v2276
      %v2293 = vunpack.c.l.b16 %v2277
      %v2294 = vunpack.c.l.b16 %v2278
      %v2295 = vunpack.c.l.b16 %v2279
      %v2296 = vunpack.c.l.b16 %v2280
      %v2297 = vunpack.c.l.b16 %v2281
      %v2298 = vunpack.c.l.b16 %v2282
      %v2299 = vunpack.c.l.b16 %v2283
      %v2300 = vpack.c.b16 %v2293, %v2292
      %v2301 = vpack.c.b16 %v2295, %v2294
      %v2302 = vpack.c.b16 %v2297, %v2296
      %v2303 = vpack.c.b16 %v2299, %v2298
      %2308 = vmatpush.bf16.msra.mxu0 0
      %2309 = vmatpush.bf16.msra.mxu0 0
      %2310 = vmatpush.bf16.msra.mxu0 0
      %2311 = vmatpush.bf16.msra.mxu0 0
      %2312 = vmatpush.bf16.msra.mxu0 %v2303
      %2313 = vmatpush.bf16.msra.mxu0 %v2302
      %2314 = vmatpush.bf16.msra.mxu0 %v2301
      %2315 = vmatpush.bf16.msra.mxu0 %v2300
      %2316 = vmatmul.bf16.gmra.mxu0 %v2078
      %v2317 = vpop.f32.mrf.mxu0
      %v2318 = vadd.f32 0.0, %v2317
      %v2319 = vpop.f32.mrf.mxu0
      %2320 = vdwg.mxu0
      %s2321 = scalar_lea.vmem %s5, 24
      %v2322 = vld [vmem:[%s2321] sm:$0xf]
      %v2323 = vld [vmem:[%s2321 + $0x4] sm:$0xf]
      %v2324 = vpack.c.bf16 %v2318, %v2318
      %v2327 = vunpack.c.l.b16 %v2322
      %v2328 = vunpack.c.l.b16 %v2323
      %v2329 = vpack.c.b16 %v2328, %v2327
      %v2331 = vsel %vm2151, %v2329, 0
      %v2334 = vsel %vm2155, %v2324, 0
      %2336 = vmatpush.bf16.msra.mxu0 0
      %2337 = vmatpush.bf16.msra.mxu0 0
      %2338 = vmatpush.bf16.msra.mxu0 0
      %2339 = vmatpush.bf16.msra.mxu0 0
      %2340 = vmatpush.bf16.msra.mxu0 0
      %2341 = vmatpush.bf16.msra.mxu0 0
      %2342 = vmatpush.bf16.msra.mxu0 0
      %2343 = vmatpush.bf16.msra.mxu0 %v2334
      %2344 = vmatmul.bf16.gmra.mxu0 %v2331
      %v2345 = vpop.f32.mrf.mxu0
      %v2346 = vadd.f32 0.0, %v2345
      %v2347 = vpop.f32.mrf.mxu0
      %v2348 = vadd.f32 0.0, %v2347
      %2349 = vdwg.mxu0
      %v2350 = vadd.f32 %v2273, %v2346
      %v2351 = vadd.f32 %v2274, %v2348
      %s2352 = scalar_lea.vmem %s4, 128
      %v2353 = vld [vmem:[%s2352] sm:$0xf]
      %v2354 = vld [vmem:[%s2352 + $0x4] sm:$0xf]
      %v2355 = vld [vmem:[%s2352 + $0x8] sm:$0xf]
      %v2356 = vld [vmem:[%s2352 + $0xc] sm:$0xf]
      %v2357 = vld [vmem:[%s2352 + $0x10] sm:$0xf]
      %v2358 = vld [vmem:[%s2352 + $0x14] sm:$0xf]
      %v2359 = vld [vmem:[%s2352 + $0x18] sm:$0xf]
      %v2360 = vld [vmem:[%s2352 + $0x1c] sm:$0xf]
      %v2369 = vunpack.c.l.b16 %v2353
      %v2370 = vunpack.c.l.b16 %v2354
      %v2371 = vunpack.c.l.b16 %v2355
      %v2372 = vunpack.c.l.b16 %v2356
      %v2373 = vunpack.c.l.b16 %v2357
      %v2374 = vunpack.c.l.b16 %v2358
      %v2375 = vunpack.c.l.b16 %v2359
      %v2376 = vunpack.c.l.b16 %v2360
      %v2377 = vpack.c.b16 %v2370, %v2369
      %v2378 = vpack.c.b16 %v2372, %v2371
      %v2379 = vpack.c.b16 %v2374, %v2373
      %v2380 = vpack.c.b16 %v2376, %v2375
      %2385 = vmatpush.bf16.msra.mxu0 0
      %2386 = vmatpush.bf16.msra.mxu0 0
      %2387 = vmatpush.bf16.msra.mxu0 0
      %2388 = vmatpush.bf16.msra.mxu0 0
      %2389 = vmatpush.bf16.msra.mxu0 %v2380
      %2390 = vmatpush.bf16.msra.mxu0 %v2379
      %2391 = vmatpush.bf16.msra.mxu0 %v2378
      %2392 = vmatpush.bf16.msra.mxu0 %v2377
      %2393 = vmatmul.bf16.gmra.mxu0 %v2078
      %v2394 = vpop.f32.mrf.mxu0
      %v2395 = vadd.f32 0.0, %v2394
      %v2396 = vpop.f32.mrf.mxu0
      %2397 = vdwg.mxu0
      %s2398 = scalar_lea.vmem %s5, 32
      %v2399 = vld [vmem:[%s2398] sm:$0xf]
      %v2400 = vld [vmem:[%s2398 + $0x4] sm:$0xf]
      %v2401 = vpack.c.bf16 %v2395, %v2395
      %v2404 = vunpack.c.l.b16 %v2399
      %v2405 = vunpack.c.l.b16 %v2400
      %v2406 = vpack.c.b16 %v2405, %v2404
      %v2408 = vsel %vm2151, %v2406, 0
      %v2411 = vsel %vm2155, %v2401, 0
      %2413 = vmatpush.bf16.msra.mxu0 0
      %2414 = vmatpush.bf16.msra.mxu0 0
      %2415 = vmatpush.bf16.msra.mxu0 0
      %2416 = vmatpush.bf16.msra.mxu0 0
      %2417 = vmatpush.bf16.msra.mxu0 0
      %2418 = vmatpush.bf16.msra.mxu0 0
      %2419 = vmatpush.bf16.msra.mxu0 0
      %2420 = vmatpush.bf16.msra.mxu0 %v2411
      %2421 = vmatmul.bf16.gmra.mxu0 %v2408
      %v2422 = vpop.f32.mrf.mxu0
      %v2423 = vadd.f32 0.0, %v2422
      %v2424 = vpop.f32.mrf.mxu0
      %v2425 = vadd.f32 0.0, %v2424
      %2426 = vdwg.mxu0
      %v2427 = vadd.f32 %v2350, %v2423
      %v2428 = vadd.f32 %v2351, %v2425
      %s2429 = scalar_lea.vmem %s4, 160
      %v2430 = vld [vmem:[%s2429] sm:$0xf]
      %v2431 = vld [vmem:[%s2429 + $0x4] sm:$0xf]
      %v2432 = vld [vmem:[%s2429 + $0x8] sm:$0xf]
      %v2433 = vld [vmem:[%s2429 + $0xc] sm:$0xf]
      %v2434 = vld [vmem:[%s2429 + $0x10] sm:$0xf]
      %v2435 = vld [vmem:[%s2429 + $0x14] sm:$0xf]
      %v2436 = vld [vmem:[%s2429 + $0x18] sm:$0xf]
      %v2437 = vld [vmem:[%s2429 + $0x1c] sm:$0xf]
      %v2446 = vunpack.c.l.b16 %v2430
      %v2447 = vunpack.c.l.b16 %v2431
      %v2448 = vunpack.c.l.b16 %v2432
      %v2449 = vunpack.c.l.b16 %v2433
      %v2450 = vunpack.c.l.b16 %v2434
      %v2451 = vunpack.c.l.b16 %v2435
      %v2452 = vunpack.c.l.b16 %v2436
      %v2453 = vunpack.c.l.b16 %v2437
      %v2454 = vpack.c.b16 %v2447, %v2446
      %v2455 = vpack.c.b16 %v2449, %v2448
      %v2456 = vpack.c.b16 %v2451, %v2450
      %v2457 = vpack.c.b16 %v2453, %v2452
      %2462 = vmatpush.bf16.msra.mxu0 0
      %2463 = vmatpush.bf16.msra.mxu0 0
      %2464 = vmatpush.bf16.msra.mxu0 0
      %2465 = vmatpush.bf16.msra.mxu0 0
      %2466 = vmatpush.bf16.msra.mxu0 %v2457
      %2467 = vmatpush.bf16.msra.mxu0 %v2456
      %2468 = vmatpush.bf16.msra.mxu0 %v2455
      %2469 = vmatpush.bf16.msra.mxu0 %v2454
      %2470 = vmatmul.bf16.gmra.mxu0 %v2078
      %v2471 = vpop.f32.mrf.mxu0
      %v2472 = vadd.f32 0.0, %v2471
      %v2473 = vpop.f32.mrf.mxu0
      %2474 = vdwg.mxu0
      %s2475 = scalar_lea.vmem %s5, 40
      %v2476 = vld [vmem:[%s2475] sm:$0xf]
      %v2477 = vld [vmem:[%s2475 + $0x4] sm:$0xf]
      %v2478 = vpack.c.bf16 %v2472, %v2472
      %v2481 = vunpack.c.l.b16 %v2476
      %v2482 = vunpack.c.l.b16 %v2477
      %v2483 = vpack.c.b16 %v2482, %v2481
      %v2485 = vsel %vm2151, %v2483, 0
      %v2488 = vsel %vm2155, %v2478, 0
      %2490 = vmatpush.bf16.msra.mxu0 0
      %2491 = vmatpush.bf16.msra.mxu0 0
      %2492 = vmatpush.bf16.msra.mxu0 0
      %2493 = vmatpush.bf16.msra.mxu0 0
      %2494 = vmatpush.bf16.msra.mxu0 0
      %2495 = vmatpush.bf16.msra.mxu0 0
      %2496 = vmatpush.bf16.msra.mxu0 0
      %2497 = vmatpush.bf16.msra.mxu0 %v2488
      %2498 = vmatmul.bf16.gmra.mxu0 %v2485
      %v2499 = vpop.f32.mrf.mxu0
      %v2500 = vadd.f32 0.0, %v2499
      %v2501 = vpop.f32.mrf.mxu0
      %v2502 = vadd.f32 0.0, %v2501
      %2503 = vdwg.mxu0
      %v2504 = vadd.f32 %v2427, %v2500
      %v2505 = vadd.f32 %v2428, %v2502
      %s2506 = scalar_lea.vmem %s4, 192
      %v2507 = vld [vmem:[%s2506] sm:$0xf]
      %v2508 = vld [vmem:[%s2506 + $0x4] sm:$0xf]
      %v2509 = vld [vmem:[%s2506 + $0x8] sm:$0xf]
      %v2510 = vld [vmem:[%s2506 + $0xc] sm:$0xf]
      %v2511 = vld [vmem:[%s2506 + $0x10] sm:$0xf]
      %v2512 = vld [vmem:[%s2506 + $0x14] sm:$0xf]
      %v2513 = vld [vmem:[%s2506 + $0x18] sm:$0xf]
      %v2514 = vld [vmem:[%s2506 + $0x1c] sm:$0xf]
      %v2523 = vunpack.c.l.b16 %v2507
      %v2524 = vunpack.c.l.b16 %v2508
      %v2525 = vunpack.c.l.b16 %v2509
      %v2526 = vunpack.c.l.b16 %v2510
      %v2527 = vunpack.c.l.b16 %v2511
      %v2528 = vunpack.c.l.b16 %v2512
      %v2529 = vunpack.c.l.b16 %v2513
      %v2530 = vunpack.c.l.b16 %v2514
      %v2531 = vpack.c.b16 %v2524, %v2523
      %v2532 = vpack.c.b16 %v2526, %v2525
      %v2533 = vpack.c.b16 %v2528, %v2527
      %v2534 = vpack.c.b16 %v2530, %v2529
      %2539 = vmatpush.bf16.msra.mxu0 0
      %2540 = vmatpush.bf16.msra.mxu0 0
      %2541 = vmatpush.bf16.msra.mxu0 0
      %2542 = vmatpush.bf16.msra.mxu0 0
      %2543 = vmatpush.bf16.msra.mxu0 %v2534
      %2544 = vmatpush.bf16.msra.mxu0 %v2533
      %2545 = vmatpush.bf16.msra.mxu0 %v2532
      %2546 = vmatpush.bf16.msra.mxu0 %v2531
      %2547 = vmatmul.bf16.gmra.mxu0 %v2078
      %v2548 = vpop.f32.mrf.mxu0
      %v2549 = vadd.f32 0.0, %v2548
      %v2550 = vpop.f32.mrf.mxu0
      %2551 = vdwg.mxu0
      %s2552 = scalar_lea.vmem %s5, 48
      %v2553 = vld [vmem:[%s2552] sm:$0xf]
      %v2554 = vld [vmem:[%s2552 + $0x4] sm:$0xf]
      %v2555 = vpack.c.bf16 %v2549, %v2549
      %v2558 = vunpack.c.l.b16 %v2553
      %v2559 = vunpack.c.l.b16 %v2554
      %v2560 = vpack.c.b16 %v2559, %v2558
      %v2562 = vsel %vm2151, %v2560, 0
      %v2565 = vsel %vm2155, %v2555, 0
      %2567 = vmatpush.bf16.msra.mxu0 0
      %2568 = vmatpush.bf16.msra.mxu0 0
      %2569 = vmatpush.bf16.msra.mxu0 0
      %2570 = vmatpush.bf16.msra.mxu0 0
      %2571 = vmatpush.bf16.msra.mxu0 0
      %2572 = vmatpush.bf16.msra.mxu0 0
      %2573 = vmatpush.bf16.msra.mxu0 0
      %2574 = vmatpush.bf16.msra.mxu0 %v2565
      %2575 = vmatmul.bf16.gmra.mxu0 %v2562
      %v2576 = vpop.f32.mrf.mxu0
      %v2577 = vadd.f32 0.0, %v2576
      %v2578 = vpop.f32.mrf.mxu0
      %v2579 = vadd.f32 0.0, %v2578
      %2580 = vdwg.mxu0
      %v2581 = vadd.f32 %v2504, %v2577
      %v2582 = vadd.f32 %v2505, %v2579
      %s2583 = scalar_lea.vmem %s4, 224
      %v2584 = vld [vmem:[%s2583] sm:$0xf]
      %v2585 = vld [vmem:[%s2583 + $0x4] sm:$0xf]
      %v2586 = vld [vmem:[%s2583 + $0x8] sm:$0xf]
      %v2587 = vld [vmem:[%s2583 + $0xc] sm:$0xf]
      %v2588 = vld [vmem:[%s2583 + $0x10] sm:$0xf]
      %v2589 = vld [vmem:[%s2583 + $0x14] sm:$0xf]
      %v2590 = vld [vmem:[%s2583 + $0x18] sm:$0xf]
      %v2591 = vld [vmem:[%s2583 + $0x1c] sm:$0xf]
      %v2600 = vunpack.c.l.b16 %v2584
      %v2601 = vunpack.c.l.b16 %v2585
      %v2602 = vunpack.c.l.b16 %v2586
      %v2603 = vunpack.c.l.b16 %v2587
      %v2604 = vunpack.c.l.b16 %v2588
      %v2605 = vunpack.c.l.b16 %v2589
      %v2606 = vunpack.c.l.b16 %v2590
      %v2607 = vunpack.c.l.b16 %v2591
      %v2608 = vpack.c.b16 %v2601, %v2600
      %v2609 = vpack.c.b16 %v2603, %v2602
      %v2610 = vpack.c.b16 %v2605, %v2604
      %v2611 = vpack.c.b16 %v2607, %v2606
      %2616 = vmatpush.bf16.msra.mxu0 0
      %2617 = vmatpush.bf16.msra.mxu0 0
      %2618 = vmatpush.bf16.msra.mxu0 0
      %2619 = vmatpush.bf16.msra.mxu0 0
      %2620 = vmatpush.bf16.msra.mxu0 %v2611
      %2621 = vmatpush.bf16.msra.mxu0 %v2610
      %2622 = vmatpush.bf16.msra.mxu0 %v2609
      %2623 = vmatpush.bf16.msra.mxu0 %v2608
      %2624 = vmatmul.bf16.gmra.mxu0 %v2078
      %v2625 = vpop.f32.mrf.mxu0
      %v2626 = vadd.f32 0.0, %v2625
      %v2627 = vpop.f32.mrf.mxu0
      %2628 = vdwg.mxu0
      %s2629 = scalar_lea.vmem %s5, 56
      %v2630 = vld [vmem:[%s2629] sm:$0xf]
      %v2631 = vld [vmem:[%s2629 + $0x4] sm:$0xf]
      %v2632 = vpack.c.bf16 %v2626, %v2626
      %v2635 = vunpack.c.l.b16 %v2630
      %v2636 = vunpack.c.l.b16 %v2631
      %v2637 = vpack.c.b16 %v2636, %v2635
      %v2639 = vsel %vm2151, %v2637, 0
      %v2642 = vsel %vm2155, %v2632, 0
      %2644 = vmatpush.bf16.msra.mxu0 0
      %2645 = vmatpush.bf16.msra.mxu0 0
      %2646 = vmatpush.bf16.msra.mxu0 0
      %2647 = vmatpush.bf16.msra.mxu0 0
      %2648 = vmatpush.bf16.msra.mxu0 0
      %2649 = vmatpush.bf16.msra.mxu0 0
      %2650 = vmatpush.bf16.msra.mxu0 0
      %2651 = vmatpush.bf16.msra.mxu0 %v2642
      %2652 = vmatmul.bf16.gmra.mxu0 %v2639
      %v2653 = vpop.f32.mrf.mxu0
      %v2654 = vadd.f32 0.0, %v2653
      %v2655 = vpop.f32.mrf.mxu0
      %v2656 = vadd.f32 0.0, %v2655
      %2657 = vdwg.mxu0
      %v2658 = vadd.f32 %v2581, %v2654
      %v2659 = vadd.f32 %v2582, %v2656
      %s2660 = scalar_lea.vmem %s4, 256
      %v2661 = vld [vmem:[%s2660] sm:$0xf]
      %v2662 = vld [vmem:[%s2660 + $0x4] sm:$0xf]
      %v2663 = vld [vmem:[%s2660 + $0x8] sm:$0xf]
      %v2664 = vld [vmem:[%s2660 + $0xc] sm:$0xf]
      %v2665 = vld [vmem:[%s2660 + $0x10] sm:$0xf]
      %v2666 = vld [vmem:[%s2660 + $0x14] sm:$0xf]
      %v2667 = vld [vmem:[%s2660 + $0x18] sm:$0xf]
      %v2668 = vld [vmem:[%s2660 + $0x1c] sm:$0xf]
      %v2677 = vunpack.c.l.b16 %v2661
      %v2678 = vunpack.c.l.b16 %v2662
      %v2679 = vunpack.c.l.b16 %v2663
      %v2680 = vunpack.c.l.b16 %v2664
      %v2681 = vunpack.c.l.b16 %v2665
      %v2682 = vunpack.c.l.b16 %v2666
      %v2683 = vunpack.c.l.b16 %v2667
      %v2684 = vunpack.c.l.b16 %v2668
      %v2685 = vpack.c.b16 %v2678, %v2677
      %v2686 = vpack.c.b16 %v2680, %v2679
      %v2687 = vpack.c.b16 %v2682, %v2681
      %v2688 = vpack.c.b16 %v2684, %v2683
      %2693 = vmatpush.bf16.msra.mxu0 0
      %2694 = vmatpush.bf16.msra.mxu0 0
      %2695 = vmatpush.bf16.msra.mxu0 0
      %2696 = vmatpush.bf16.msra.mxu0 0
      %2697 = vmatpush.bf16.msra.mxu0 %v2688
      %2698 = vmatpush.bf16.msra.mxu0 %v2687
      %2699 = vmatpush.bf16.msra.mxu0 %v2686
      %2700 = vmatpush.bf16.msra.mxu0 %v2685
      %2701 = vmatmul.bf16.gmra.mxu0 %v2078
      %v2702 = vpop.f32.mrf.mxu0
      %v2703 = vadd.f32 0.0, %v2702
      %v2704 = vpop.f32.mrf.mxu0
      %2705 = vdwg.mxu0
      %s2706 = scalar_lea.vmem %s5, 64
      %v2707 = vld [vmem:[%s2706] sm:$0xf]
      %v2708 = vld [vmem:[%s2706 + $0x4] sm:$0xf]
      %v2709 = vpack.c.bf16 %v2703, %v2703
      %v2712 = vunpack.c.l.b16 %v2707
      %v2713 = vunpack.c.l.b16 %v2708
      %v2714 = vpack.c.b16 %v2713, %v2712
      %v2716 = vsel %vm2151, %v2714, 0
      %v2719 = vsel %vm2155, %v2709, 0
      %2721 = vmatpush.bf16.msra.mxu0 0
      %2722 = vmatpush.bf16.msra.mxu0 0
      %2723 = vmatpush.bf16.msra.mxu0 0
      %2724 = vmatpush.bf16.msra.mxu0 0
      %2725 = vmatpush.bf16.msra.mxu0 0
      %2726 = vmatpush.bf16.msra.mxu0 0
      %2727 = vmatpush.bf16.msra.mxu0 0
      %2728 = vmatpush.bf16.msra.mxu0 %v2719
      %2729 = vmatmul.bf16.gmra.mxu0 %v2716
      %v2730 = vpop.f32.mrf.mxu0
      %v2731 = vadd.f32 0.0, %v2730
      %v2732 = vpop.f32.mrf.mxu0
      %v2733 = vadd.f32 0.0, %v2732
      %2734 = vdwg.mxu0
      %v2735 = vadd.f32 %v2658, %v2731
      %v2736 = vadd.f32 %v2659, %v2733
      %v2737 = vld [vmem:[%s6] sm:$0xff]
      %v2738 = vld [vmem:[%s6 + $0x8] sm:$0xff]
      %2740 = vset.pattern.permute.xlu0 0
      %2741 = vperm.xlu0 %2740, %v2737
      %v2742 = vpop.permute.xlu0 %2741
      %2745 = vset.pattern.permute.xlu0 0
      %2746 = vperm.xlu0 %2745, %v2738
      %v2747 = vpop.permute.xlu0 %2746
      %v2749 = vadd.f32 %v2735, %v2742
      %v2750 = vadd.f32 %v2736, %v2747
      %v2751 = vmax.f32 %v2749, 0.0
      %v2752 = vmax.f32 %v2750, 0.0
      %v2753 = vld [vmem:[%s7] sm:$0x3]
      %v2754 = vpack.c.bf16 %v2752, %v2751
      %v2755 = vld [vmem:[%s8] sm:$0x7]
      %2757 = vset.pattern.permute.xlu0 0
      %2758 = vperm.xlu0 %2757, %v2755
      %v2759 = vpop.permute.xlu0 %2758
      %vm2761 = vcmask 130048
      %v2763 = vsel %vm2761, %v2753, 0
      %2765 = vmatpush.bf16.msra.mxu0 0
      %2766 = vmatpush.bf16.msra.mxu0 0
      %2767 = vmatpush.bf16.msra.mxu0 0
      %2768 = vmatpush.bf16.msra.mxu0 0
      %2769 = vmatpush.bf16.msra.mxu0 0
      %2770 = vmatpush.bf16.msra.mxu0 0
      %2771 = vmatpush.bf16.msra.mxu0 0
      %2772 = vmatpush.bf16.msra.mxu0 %v2754
      %2773 = vmatmul.bf16.gmra.mxu0 %v2763
      %v2774 = vpop.f32.mrf.mxu0
      %v2775 = vadd.f32 %v2759, %v2774
      %v2776 = vpop.f32.mrf.mxu0
      %2777 = vdwg.mxu0
      %v2778 = vpack.c.bf16 %v2775, %v2775
      %v2779 = vld [vmem:[%s9] sm:$0xf]
      %v2780 = vld [vmem:[%s9 + $0x4] sm:$0xf]
      %v2783 = vunpack.c.l.b16 %v2779
      %v2784 = vunpack.c.l.b16 %v2780
      %v2785 = vpack.c.b16 %v2784, %v2783
      %v2788 = vsel %vm2761, %v2778, 0
      %2790 = vmatpush.bf16.msra.mxu0 0
      %2791 = vmatpush.bf16.msra.mxu0 0
      %2792 = vmatpush.bf16.msra.mxu0 0
      %2793 = vmatpush.bf16.msra.mxu0 0
      %2794 = vmatpush.bf16.msra.mxu0 0
      %2795 = vmatpush.bf16.msra.mxu0 0
      %2796 = vmatpush.bf16.msra.mxu0 0
      %2797 = vmatpush.bf16.msra.mxu0 %v2785
      %2798 = vmatmul.bf16.gmra.mxu0 %v2788
      %v2799 = vpop.f32.mrf.mxu0
      %v2800 = vadd.f32 0.0, %v2799
      %v2801 = vpop.f32.mrf.mxu0
      %2802 = vdwg.mxu0
      %v2803 = vpack.c.bf16 %v2800, %v2800
      %v2804 = vld [vmem:[%s10] sm:$0xff]
      %v2805 = vld [vmem:[%s10 + $0x8] sm:$0xff]
      %v2806 = vld [vmem:[%s10 + $0x10] sm:$0xff]
      %v2807 = vld [vmem:[%s10 + $0x18] sm:$0xff]
      %v2808 = vld [vmem:[%s10 + $0x20] sm:$0xff]
      %v2809 = vld [vmem:[%s10 + $0x28] sm:$0xff]
      %v2810 = vld [vmem:[%s10 + $0x30] sm:$0xff]
      %v2811 = vld [vmem:[%s10 + $0x38] sm:$0xff]
      %v2820 = vunpack.c.l.b16 %v2804
      %v2821 = vunpack.c.h.b16 %v2804
      %v2822 = vunpack.c.l.b16 %v2805
      %v2823 = vunpack.c.h.b16 %v2805
      %v2824 = vunpack.c.l.b16 %v2806
      %v2825 = vunpack.c.h.b16 %v2806
      %v2826 = vunpack.c.l.b16 %v2807
      %v2827 = vunpack.c.h.b16 %v2807
      %v2828 = vunpack.c.l.b16 %v2808
      %v2829 = vunpack.c.h.b16 %v2808
      %v2830 = vunpack.c.l.b16 %v2809
      %v2831 = vunpack.c.h.b16 %v2809
      %v2832 = vunpack.c.l.b16 %v2810
      %v2833 = vunpack.c.h.b16 %v2810
      %v2834 = vunpack.c.l.b16 %v2811
      %v2835 = vunpack.c.h.b16 %v2811
      %v2836 = vpack.c.b16 %v2822, %v2820
      %v2837 = vpack.c.b16 %v2823, %v2821
      %v2838 = vpack.c.b16 %v2826, %v2824
      %v2839 = vpack.c.b16 %v2827, %v2825
      %v2840 = vpack.c.b16 %v2830, %v2828
      %v2841 = vpack.c.b16 %v2831, %v2829
      %v2842 = vpack.c.b16 %v2834, %v2832
      %v2843 = vpack.c.b16 %v2835, %v2833
      %v2853 = vsel %vm2076, %v2803, 0
      %2855 = vmatpush.bf16.msra.mxu0 0
      %2856 = vmatpush.bf16.msra.mxu0 0
      %2857 = vmatpush.bf16.msra.mxu0 0
      %2858 = vmatpush.bf16.msra.mxu0 0
      %2859 = vmatpush.bf16.msra.mxu0 %v2842
      %2860 = vmatpush.bf16.msra.mxu0 %v2840
      %2861 = vmatpush.bf16.msra.mxu0 %v2838
      %2862 = vmatpush.bf16.msra.mxu0 %v2836
      %2863 = vmatmul.bf16.gmra.mxu0 %v2853
      %v2864 = vpop.f32.mrf.mxu0
      %v2865 = vadd.f32 0.0, %v2864
      %v2866 = vpop.f32.mrf.mxu0
      %2867 = vdwg.mxu0
      %2868 = vmatpush.bf16.msra.mxu0 0
      %2869 = vmatpush.bf16.msra.mxu0 0
      %2870 = vmatpush.bf16.msra.mxu0 0
      %2871 = vmatpush.bf16.msra.mxu0 0
      %2872 = vmatpush.bf16.msra.mxu0 %v2843
      %2873 = vmatpush.bf16.msra.mxu0 %v2841
      %2874 = vmatpush.bf16.msra.mxu0 %v2839
      %2875 = vmatpush.bf16.msra.mxu0 %v2837
      %2876 = vmatmul.bf16.gmra.mxu0 %v2853
      %v2877 = vpop.f32.mrf.mxu0
      %v2878 = vadd.f32 0.0, %v2877
      %v2879 = vpop.f32.mrf.mxu0
      %2880 = vdwg.mxu0
      %v2883 = vrot.slane %v2878, 4
      %v2884 = vsel %vm2155, %v2865, %v2883
      %2886 = vst [vmem:[%s386] sm:$0x77] %v2884
      %p2887 = scmp.lt.s32.totalorder %s22, 1
      %s2888 = scalar_select %p2887, %s22, 1
      %s2889 = smul.addr %s2888, 2
      %s2890 = smul.addr %s2889, 4
      %s2891 = scalar_lea.vmem %s11, %s2890
      // Predicated region
      $region65: #{tpu_custom_call.1} parent=63 // pred_check
        %p2892 = pneg %p276
      $region66: #{tpu_custom_call.1} parent=63 // pred_check_branch
        %2894 = sbr.rel (%p2892) target = $region68
      $region67: #{tpu_custom_call.1} parent=63 // pred_region
        _
      $region68: #{tpu_custom_call.1} parent=63 // pred_fallthru
        _
    $region64: #{tpu_custom_call.1} parent=5 // pred_fallthru
      _
    %p2895 = scmp.le.s32.totalorder 2, %s17
    // Predicated region
    $region69: #{tpu_custom_call.1} parent=5 // pred_check
      %p2896 = pneg %p2895
    $region70: #{tpu_custom_call.1} parent=5 // pred_check_branch
      %2898 = sbr.rel (%p2896) target = $region72
    $region71: #{tpu_custom_call.1} parent=5 // pred_region
      %s2899 = ssub.s32 %s17, 2
      // Predicated region
      $region73: #{tpu_custom_call.1} parent=71 // pred_check
        %p2900 = pneg %p282
      $region74: #{tpu_custom_call.1} parent=71 // pred_check_branch
        %2902 = sbr.rel (%p2900) target = $region76
      $region75: #{tpu_custom_call.1} parent=71 // pred_region
        %p2903 = scmp.lt.s32.totalorder %s23, 1
        %s2904 = scalar_select %p2903, %s23, 1
        %s2905 = smul.addr %s2904, 2
        %s2906 = smul.addr %s2905, 4
        %s2907 = scalar_lea.vmem %s11, %s2906
      $region76: #{tpu_custom_call.1} parent=71 // pred_fallthru
        _
    $region72: #{tpu_custom_call.1} parent=5 // pred_fallthru
      _
  $region6: #{tpu_custom_call.1} parent=0 // loop_footer
    %s21 = sadd.s32 1, %s17
  $region7: #{tpu_custom_call.1} parent=0 // loop_footer_branch
    %16 = sbr.rel target = $region3
  $region8: #{tpu_custom_call.1} parent=0 // loop_exit
    _

</llo_original>
